<compile_context>
chip_gen: v6e
topology: v6e:2x2x1
jax: 0.10.0
libtpu: 0.0.40
codegen_flags: <defaults>
</compile_context>

<pallas_src>
import jax
import jax.numpy as jnp
from jax.experimental import pallas as pl
from jax.experimental.pallas import tpu as pltpu

NODE_FEATURES = 32
GNN_HIDDEN_DIM = 32
GRAPH_EMBEDDING_DIM = 16
HEADS1 = 4
OUT_LANES = 128  # lane-dense output slab width

VMEM_SPEC = pl.BlockSpec(memory_space=pltpu.MemorySpace.VMEM)


def _leaky_relu(x, slope=0.2):
    return jnp.where(x > 0, x, slope * x)


def _gat(x_b, w, att, bias, mask_bias, *, heads, fout):
    """Dense-adjacency GATConv (heads concatenated) + bias + ReLU.

    x_b       : (N, Fin)          bf16 activations
    w         : (Fin, heads*fout) bf16 weight
    att       : (heads*fout, 2H)  bf16 block-diag attention matrix
                (cols 0:H = src/neighbor term, cols H:2H = dst term)
    bias      : (1, heads*fout)   f32
    mask_bias : (N, N)            f32 additive mask (0 / -1e30), edge j -> i
    returns   : (N, heads*fout)   bf16 (post bias + ReLU)
    """
    n = x_b.shape[0]
    # One wide matmul for all heads; bf16 operands, f32 accumulation.
    h = jnp.dot(x_b, w, preferred_element_type=jnp.float32)        # (N, H*F)
    h_b = h.astype(jnp.bfloat16)                                    # cast once

    # Attention scores for all heads on the MXU (no reshape / XLU reduce).
    scores = jnp.dot(h_b, att, preferred_element_type=jnp.float32)  # (N, 2H)
    # Source term must live along lanes: one tiny (N,H)->(H,N) transpose.
    a_src_t = scores[:, :heads].T                                    # (H, N)

    outs = []
    for hd in range(heads):
        a_dst_col = scores[:, heads + hd:heads + hd + 1]             # (N, 1)
        a_src_row = a_src_t[hd][None, :]                             # (1, N)
        # e[i, j] = leaky_relu(a_dst[i] + a_src[j]) + mask_bias[i, j]
        e = _leaky_relu(a_dst_col + a_src_row) + mask_bias           # (N, N)
        # Masked row-softmax over source nodes j (lane axis); normalization is
        # applied AFTER aggregation so the multiply is (N,F) not (N,N).
        m = jnp.max(e, axis=-1, keepdims=True)                       # (N, 1)
        p = jnp.exp(e - m)                                           # (N, N)
        inv = 1.0 / jnp.sum(p, axis=-1, keepdims=True)               # exact
        h_head = h_b[:, hd * fout:(hd + 1) * fout]                   # (N, F)
        agg = jnp.dot(p.astype(jnp.bfloat16), h_head,
                      preferred_element_type=jnp.float32)            # (N, F)
        outs.append(agg * inv)
    out = outs[0] if heads == 1 else jnp.concatenate(outs, axis=-1)  # (N, H*F)

    # bias + ReLU, cast once for the next layer's MXU operands.
    return jnp.maximum(out + bias, 0.0).astype(jnp.bfloat16)


def fused_gnn_kernel(x_ref, maskb_ref, anorm_ref, pool_ref,
                     w1_ref, att1_ref, bias1_ref,
                     w2_ref, att2_ref, bias2_ref,
                     w3_ref, b3_ref,
                     aw1_ref, ab1_ref, aw2_ref, ab2_ref, aw3_ref, ab3_ref,
                     ew_ref, eb_ref,
                     out_ref):
    mask_bias = maskb_ref[...]                                       # (N, N) f32

    # conv1: GATConv(32 -> 32, heads=4, concat) + ReLU   (dropout = eval identity)
    h_b = _gat(x_ref[...], w1_ref[...], att1_ref[...], bias1_ref[...],
               mask_bias, heads=HEADS1, fout=GNN_HIDDEN_DIM)

    # conv2: GATConv(128 -> 32, heads=1) + ReLU
    h_b = _gat(h_b, w2_ref[...], att2_ref[...], bias2_ref[...],
               mask_bias, heads=1, fout=GNN_HIDDEN_DIM)

    # conv3: GCNConv(32 -> 16) + ReLU:  relu(A_norm @ (h @ W) + b)
    xw = jnp.dot(h_b, w3_ref[...], preferred_element_type=jnp.float32)     # (N, 16)
    h3 = jnp.maximum(
        jnp.dot(anorm_ref[...], xw.astype(jnp.bfloat16),
                preferred_element_type=jnp.float32) + b3_ref[...], 0.0)
    h3_b = h3.astype(jnp.bfloat16)

    # global_mean_pool: pool rows already hold 1/|graph_g|.
    pooled = jnp.dot(pool_ref[...], h3_b,
                     preferred_element_type=jnp.float32)                   # (G, 16)
    pooled_b = pooled.astype(jnp.bfloat16)

    # anomaly head: Linear->ReLU->(Dropout=id)->Linear->ReLU->Linear->Sigmoid
    a1 = jnp.maximum(
        jnp.dot(pooled_b, aw1_ref[...],
                preferred_element_type=jnp.float32) + ab1_ref[...], 0.0)
    a2 = jnp.maximum(
        jnp.dot(a1.astype(jnp.bfloat16), aw2_ref[...],
                preferred_element_type=jnp.float32) + ab2_ref[...], 0.0)
    logits = jnp.dot(a2.astype(jnp.bfloat16), aw3_ref[...],
                     preferred_element_type=jnp.float32) + ab3_ref[...]    # (G, 1)
    score = jax.nn.sigmoid(logits)

    # graph embedding head: Linear -> Tanh
    emb = jnp.tanh(
        jnp.dot(pooled_b, ew_ref[...],
                preferred_element_type=jnp.float32) + eb_ref[...])         # (G, 16)

    # Single lane-dense (G, 128) store: [emb | score | zero padding].
    g = out_ref.shape[0]
    pad = jnp.zeros((g, OUT_LANES - GRAPH_EMBEDDING_DIM - 1), jnp.float32)
    out_ref[...] = jnp.concatenate([emb, score, pad], axis=-1)


def session_graph_gnn_forward(params, x_bf16, mask_bias, anorm_bf16, pool_bf16):
    g = pool_bf16.shape[0]
    out = pl.pallas_call(
        fused_gnn_kernel,
        out_shape=jax.ShapeDtypeStruct((g, OUT_LANES), jnp.float32),
        in_specs=[VMEM_SPEC] * 20,
        out_specs=VMEM_SPEC,
        # Explicit VMEM budget (headroom only at these shapes; stays valid on
        # v7x's 64 MiB/TC VMEM).
        compiler_params=pltpu.CompilerParams(vmem_limit_bytes=32 * 1024 * 1024),
    )(x_bf16, mask_bias, anorm_bf16, pool_bf16,
      params["w1"], params["att1"], params["bias1"],
      params["w2"], params["att2"], params["bias2"],
      params["w3"], params["b3"],
      params["aw1"], params["ab1"], params["aw2"], params["ab2"],
      params["aw3"], params["ab3"],
      params["ew"], params["eb"])
    emb = out[:, :GRAPH_EMBEDDING_DIM]
    scores = out[:, GRAPH_EMBEDDING_DIM:GRAPH_EMBEDDING_DIM + 1]
    return scores, emb


def _pack_att(asrc, adst):
    """Pack per-head attention vectors into a (H*F, 2H) block-diagonal bf16
    matrix so a_src/a_dst become one MXU matmul: scores = h @ att."""
    heads, fout = asrc.shape
    att = jnp.zeros((heads * fout, 2 * heads), jnp.float32)
    for h in range(heads):
        rows = slice(h * fout, (h + 1) * fout)
        att = att.at[rows, h].set(asrc[h])
        att = att.at[rows, heads + h].set(adst[h])
    return att.astype(jnp.bfloat16)


def make_params(key):
    bf16 = jnp.bfloat16

    def nrm(k, shape, dtype=jnp.float32, scale=0.1):
        return (scale * jax.random.normal(k, shape, dtype=jnp.float32)).astype(dtype)

    keys = jax.random.split(key, 16)
    p = {
        # conv1: GATConv(32 -> 32, heads=4)
        "w1": nrm(keys[0], (NODE_FEATURES, HEADS1 * GNN_HIDDEN_DIM), bf16),
        "att1": _pack_att(nrm(keys[1], (HEADS1, GNN_HIDDEN_DIM)),
                          nrm(keys[2], (HEADS1, GNN_HIDDEN_DIM))),
        "bias1": nrm(keys[3], (1, HEADS1 * GNN_HIDDEN_DIM)),
        # conv2: GATConv(128 -> 32, heads=1)
        "w2": nrm(keys[4], (HEADS1 * GNN_HIDDEN_DIM, GNN_HIDDEN_DIM), bf16),
        "att2": _pack_att(nrm(keys[5], (1, GNN_HIDDEN_DIM)),
                          nrm(keys[6], (1, GNN_HIDDEN_DIM))),
        "bias2": nrm(keys[7], (1, GNN_HIDDEN_DIM)),
        # conv3: GCNConv(32 -> 16)
        "w3": nrm(keys[8], (GNN_HIDDEN_DIM, GNN_HIDDEN_DIM // 2), bf16),
        "b3": nrm(keys[9], (1, GNN_HIDDEN_DIM // 2)),
        # anomaly head: 16 -> 32 -> 16 -> 1 (sigmoid)
        "aw1": nrm(keys[10], (GNN_HIDDEN_DIM // 2, 32), bf16),
        "ab1": jnp.zeros((1, 32), jnp.float32),
        "aw2": nrm(keys[11], (32, 16), bf16),
        "ab2": jnp.zeros((1, 16), jnp.float32),
        "aw3": nrm(keys[12], (16, 1), bf16),
        "ab3": jnp.zeros((1, 1), jnp.float32),
        # graph embedding: 16 -> 16 (tanh)
        "ew": nrm(keys[13], (GNN_HIDDEN_DIM // 2, GRAPH_EMBEDDING_DIM), bf16),
        "eb": jnp.zeros((1, GRAPH_EMBEDDING_DIM), jnp.float32),
    }
    return p


if __name__ == "__main__":
    key = jax.random.PRNGKey(0)
    k_x, k_p = jax.random.split(key)

    # Small synthetic batched graph: 2 graphs x 8 nodes (bidirectional rings).
    # Many sessions can be batched the same way (block-diagonal adjacency).
    N, G, NODES_PER_GRAPH = 16, 2, 8
    x = jax.random.normal(k_x, (N, NODE_FEATURES), dtype=jnp.float32)
    x_bf16 = x.astype(jnp.bfloat16)

    srcs, dsts = [], []
    for g in range(G):
        base = g * NODES_PER_GRAPH
        for i in range(NODES_PER_GRAPH):
            a, b = base + i, base + (i + 1) % NODES_PER_GRAPH
            srcs += [a, b]
            dsts += [b, a]
    edge_index = jnp.array([srcs, dsts], dtype=jnp.int32)   # [2, E]
    batch = jnp.array([0] * NODES_PER_GRAPH + [1] * NODES_PER_GRAPH, jnp.int32)

    # Dense adjacency adj[dst, src] = 1, plus self-loops (as GATConv/GCNConv add),
    # shipped as an additive attention-mask bias (0 on edges, -1e30 elsewhere).
    A = jnp.zeros((N, N), jnp.float32).at[edge_index[1], edge_index[0]].set(1.0)
    a_hat = jnp.clip(A + jnp.eye(N, dtype=jnp.float32), 0.0, 1.0)
    mask_bias = jnp.where(a_hat > 0, 0.0, -1e30).astype(jnp.float32)

    # GCN symmetric normalization: D^{-1/2} (A + I) D^{-1/2}   (shipped as bf16)
    deg = jnp.sum(a_hat, axis=1)
    dinv = 1.0 / jnp.sqrt(deg)
    anorm_bf16 = (dinv[:, None] * a_hat * dinv[None, :]).astype(jnp.bfloat16)

    # Mean-pool matrix: pool[g, n] = 1/|graph_g| if batch[n] == g else 0
    onehot = (batch[None, :] == jnp.arange(G)[:, None]).astype(jnp.float32)
    pool_bf16 = (onehot / jnp.sum(onehot, axis=1, keepdims=True)).astype(jnp.bfloat16)

    params = make_params(k_p)

    scores, emb = session_graph_gnn_forward(params, x_bf16, mask_bias,
                                            anorm_bf16, pool_bf16)
    jax.block_until_ready(scores)
    jax.block_until_ready(emb)

    assert scores.shape == (G, 1) and emb.shape == (G, GRAPH_EMBEDDING_DIM)
    assert bool(jnp.all(jnp.isfinite(scores))) and bool(jnp.all(jnp.isfinite(emb)))
    assert bool(jnp.all(scores >= 0.0)) and bool(jnp.all(scores <= 1.0))
    assert bool(jnp.all(jnp.abs(emb) <= 1.0))
    print("KERNEL_OK")
</pallas_src>

<mosaic_0001>
module attributes {stable_mosaic.version = 11 : i64} {
  func.func @fused_gnn_kernel(%arg0: memref<16x32xbf16, #tpu.memory_space<vmem>>, %arg1: memref<16x16xf32, #tpu.memory_space<vmem>>, %arg2: memref<16x16xbf16, #tpu.memory_space<vmem>>, %arg3: memref<2x16xbf16, #tpu.memory_space<vmem>>, %arg4: memref<32x128xbf16, #tpu.memory_space<vmem>>, %arg5: memref<128x8xbf16, #tpu.memory_space<vmem>>, %arg6: memref<1x128xf32, #tpu.memory_space<vmem>>, %arg7: memref<128x32xbf16, #tpu.memory_space<vmem>>, %arg8: memref<32x2xbf16, #tpu.memory_space<vmem>>, %arg9: memref<1x32xf32, #tpu.memory_space<vmem>>, %arg10: memref<32x16xbf16, #tpu.memory_space<vmem>>, %arg11: memref<1x16xf32, #tpu.memory_space<vmem>>, %arg12: memref<16x32xbf16, #tpu.memory_space<vmem>>, %arg13: memref<1x32xf32, #tpu.memory_space<vmem>>, %arg14: memref<32x16xbf16, #tpu.memory_space<vmem>>, %arg15: memref<1x16xf32, #tpu.memory_space<vmem>>, %arg16: memref<16x1xbf16, #tpu.memory_space<vmem>>, %arg17: memref<1x1xf32, #tpu.memory_space<vmem>>, %arg18: memref<16x16xbf16, #tpu.memory_space<vmem>>, %arg19: memref<1x16xf32, #tpu.memory_space<vmem>>, %arg20: memref<2x128xf32, #tpu.memory_space<vmem>>) attributes {dimension_semantics = [], scalar_prefetch = 0 : i64, scratch_operands = 0 : i64, tpu.core_type = #tpu.core_type<tc>} {
    %c0 = arith.constant 0 : index
    %c0_0 = arith.constant 0 : index
    %0 = vector.load %arg1[%c0, %c0_0] : memref<16x16xf32, #tpu.memory_space<vmem>>, vector<16x16xf32>
    %c0_1 = arith.constant 0 : index
    %c0_2 = arith.constant 0 : index
    %1 = vector.load %arg0[%c0_1, %c0_2] : memref<16x32xbf16, #tpu.memory_space<vmem>>, vector<16x32xbf16>
    %c0_3 = arith.constant 0 : index
    %c0_4 = arith.constant 0 : index
    %2 = vector.load %arg4[%c0_3, %c0_4] : memref<32x128xbf16, #tpu.memory_space<vmem>>, vector<32x128xbf16>
    %c0_5 = arith.constant 0 : index
    %c0_6 = arith.constant 0 : index
    %3 = vector.load %arg5[%c0_5, %c0_6] : memref<128x8xbf16, #tpu.memory_space<vmem>>, vector<128x8xbf16>
    %c0_7 = arith.constant 0 : index
    %c0_8 = arith.constant 0 : index
    %4 = vector.load %arg6[%c0_7, %c0_8] : memref<1x128xf32, #tpu.memory_space<vmem>>, vector<1x128xf32>
    %cst = arith.constant dense<0.000000e+00> : vector<16x128xf32>
    %5 = tpu.matmul %1, %2, %cst {dimension_numbers = #tpu.dot_dimension_numbers<[1], [0], [0], [1], [0, 0, 1, 1], [], []>} : vector<16x32xbf16>, vector<32x128xbf16>, vector<16x128xf32> -> vector<16x128xf32>
    %6 = arith.truncf %5 : vector<16x128xf32> to vector<16x128xbf16>
    %cst_9 = arith.constant dense<0.000000e+00> : vector<16x8xf32>
    %7 = tpu.matmul %6, %3, %cst_9 {dimension_numbers = #tpu.dot_dimension_numbers<[1], [0], [0], [1], [0, 0, 1, 1], [], []>} : vector<16x128xbf16>, vector<128x8xbf16>, vector<16x8xf32> -> vector<16x8xf32>
    %8 = vector.extract_strided_slice %7 {offsets = [0, 0], sizes = [16, 4], strides = [1, 1]} : vector<16x8xf32> to vector<16x4xf32>
    %9 = tpu.transpose %8, [1, 0] : vector<16x4xf32> -> vector<4x16xf32>
    %10 = vector.extract_strided_slice %7 {offsets = [0, 4], sizes = [16, 1], strides = [1, 1]} : vector<16x8xf32> to vector<16x1xf32>
    %11 = vector.extract_strided_slice %9 {offsets = [0, 0], sizes = [1, 16], strides = [1, 1]} : vector<4x16xf32> to vector<1x16xf32>
    %12 = vector.shape_cast %11 : vector<1x16xf32> to vector<16xf32>
    %13 = vector.shape_cast %12 : vector<16xf32> to vector<1x16xf32>
    %14 = vector.broadcast %10 : vector<16x1xf32> to vector<16x16xf32>
    %15 = vector.broadcast %13 : vector<1x16xf32> to vector<16x16xf32>
    %16 = arith.addf %14, %15 : vector<16x16xf32>
    %cst_10 = arith.constant 0.000000e+00 : f32
    %17 = vector.broadcast %cst_10 : f32 to vector<16x16xf32>
    %18 = arith.cmpf ogt, %16, %17 : vector<16x16xf32>
    %cst_11 = arith.constant 2.000000e-01 : f32
    %19 = vector.broadcast %cst_11 : f32 to vector<16x16xf32>
    %20 = arith.mulf %19, %16 : vector<16x16xf32>
    %21 = arith.select %18, %16, %20 : vector<16x16xi1>, vector<16x16xf32>
    %22 = arith.addf %21, %0 : vector<16x16xf32>
    %cst_12 = arith.constant dense<0xFF800000> : vector<16xf32>
    %23 = vector.multi_reduction <maximumf>, %22, %cst_12 [1] : vector<16x16xf32> to vector<16xf32>
    %24 = vector.shape_cast %23 : vector<16xf32> to vector<16x1xf32>
    %25 = vector.broadcast %24 : vector<16x1xf32> to vector<16x16xf32>
    %26 = arith.subf %22, %25 : vector<16x16xf32>
    %27 = math.exp %26 : vector<16x16xf32>
    %cst_13 = arith.constant dense<0.000000e+00> : vector<16xf32>
    %28 = vector.multi_reduction <add>, %27, %cst_13 [1] : vector<16x16xf32> to vector<16xf32>
    %29 = vector.shape_cast %28 : vector<16xf32> to vector<16x1xf32>
    %cst_14 = arith.constant 1.000000e+00 : f32
    %30 = vector.broadcast %cst_14 : f32 to vector<16x1xf32>
    %31 = arith.divf %30, %29 : vector<16x1xf32>
    %32 = vector.extract_strided_slice %6 {offsets = [0, 0], sizes = [16, 32], strides = [1, 1]} : vector<16x128xbf16> to vector<16x32xbf16>
    %33 = arith.truncf %27 : vector<16x16xf32> to vector<16x16xbf16>
    %cst_15 = arith.constant dense<0.000000e+00> : vector<16x32xf32>
    %34 = tpu.matmul %33, %32, %cst_15 {dimension_numbers = #tpu.dot_dimension_numbers<[1], [0], [0], [1], [0, 0, 1, 1], [], []>} : vector<16x16xbf16>, vector<16x32xbf16>, vector<16x32xf32> -> vector<16x32xf32>
    %35 = vector.broadcast %31 : vector<16x1xf32> to vector<16x32xf32>
    %36 = arith.mulf %34, %35 : vector<16x32xf32>
    %37 = vector.extract_strided_slice %7 {offsets = [0, 5], sizes = [16, 1], strides = [1, 1]} : vector<16x8xf32> to vector<16x1xf32>
    %38 = vector.extract_strided_slice %9 {offsets = [1, 0], sizes = [1, 16], strides = [1, 1]} : vector<4x16xf32> to vector<1x16xf32>
    %39 = vector.shape_cast %38 : vector<1x16xf32> to vector<16xf32>
    %40 = vector.shape_cast %39 : vector<16xf32> to vector<1x16xf32>
    %41 = vector.broadcast %37 : vector<16x1xf32> to vector<16x16xf32>
    %42 = vector.broadcast %40 : vector<1x16xf32> to vector<16x16xf32>
    %43 = arith.addf %41, %42 : vector<16x16xf32>
    %cst_16 = arith.constant 0.000000e+00 : f32
    %44 = vector.broadcast %cst_16 : f32 to vector<16x16xf32>
    %45 = arith.cmpf ogt, %43, %44 : vector<16x16xf32>
    %cst_17 = arith.constant 2.000000e-01 : f32
    %46 = vector.broadcast %cst_17 : f32 to vector<16x16xf32>
    %47 = arith.mulf %46, %43 : vector<16x16xf32>
    %48 = arith.select %45, %43, %47 : vector<16x16xi1>, vector<16x16xf32>
    %49 = arith.addf %48, %0 : vector<16x16xf32>
    %cst_18 = arith.constant dense<0xFF800000> : vector<16xf32>
    %50 = vector.multi_reduction <maximumf>, %49, %cst_18 [1] : vector<16x16xf32> to vector<16xf32>
    %51 = vector.shape_cast %50 : vector<16xf32> to vector<16x1xf32>
    %52 = vector.broadcast %51 : vector<16x1xf32> to vector<16x16xf32>
    %53 = arith.subf %49, %52 : vector<16x16xf32>
    %54 = math.exp %53 : vector<16x16xf32>
    %cst_19 = arith.constant dense<0.000000e+00> : vector<16xf32>
    %55 = vector.multi_reduction <add>, %54, %cst_19 [1] : vector<16x16xf32> to vector<16xf32>
    %56 = vector.shape_cast %55 : vector<16xf32> to vector<16x1xf32>
    %cst_20 = arith.constant 1.000000e+00 : f32
    %57 = vector.broadcast %cst_20 : f32 to vector<16x1xf32>
    %58 = arith.divf %57, %56 : vector<16x1xf32>
    %59 = vector.extract_strided_slice %6 {offsets = [0, 32], sizes = [16, 32], strides = [1, 1]} : vector<16x128xbf16> to vector<16x32xbf16>
    %60 = arith.truncf %54 : vector<16x16xf32> to vector<16x16xbf16>
    %cst_21 = arith.constant dense<0.000000e+00> : vector<16x32xf32>
    %61 = tpu.matmul %60, %59, %cst_21 {dimension_numbers = #tpu.dot_dimension_numbers<[1], [0], [0], [1], [0, 0, 1, 1], [], []>} : vector<16x16xbf16>, vector<16x32xbf16>, vector<16x32xf32> -> vector<16x32xf32>
    %62 = vector.broadcast %58 : vector<16x1xf32> to vector<16x32xf32>
    %63 = arith.mulf %61, %62 : vector<16x32xf32>
    %64 = vector.extract_strided_slice %7 {offsets = [0, 6], sizes = [16, 1], strides = [1, 1]} : vector<16x8xf32> to vector<16x1xf32>
    %65 = vector.extract_strided_slice %9 {offsets = [2, 0], sizes = [1, 16], strides = [1, 1]} : vector<4x16xf32> to vector<1x16xf32>
    %66 = vector.shape_cast %65 : vector<1x16xf32> to vector<16xf32>
    %67 = vector.shape_cast %66 : vector<16xf32> to vector<1x16xf32>
    %68 = vector.broadcast %64 : vector<16x1xf32> to vector<16x16xf32>
    %69 = vector.broadcast %67 : vector<1x16xf32> to vector<16x16xf32>
    %70 = arith.addf %68, %69 : vector<16x16xf32>
    %cst_22 = arith.constant 0.000000e+00 : f32
    %71 = vector.broadcast %cst_22 : f32 to vector<16x16xf32>
    %72 = arith.cmpf ogt, %70, %71 : vector<16x16xf32>
    %cst_23 = arith.constant 2.000000e-01 : f32
    %73 = vector.broadcast %cst_23 : f32 to vector<16x16xf32>
    %74 = arith.mulf %73, %70 : vector<16x16xf32>
    %75 = arith.select %72, %70, %74 : vector<16x16xi1>, vector<16x16xf32>
    %76 = arith.addf %75, %0 : vector<16x16xf32>
    %cst_24 = arith.constant dense<0xFF800000> : vector<16xf32>
    %77 = vector.multi_reduction <maximumf>, %76, %cst_24 [1] : vector<16x16xf32> to vector<16xf32>
    %78 = vector.shape_cast %77 : vector<16xf32> to vector<16x1xf32>
    %79 = vector.broadcast %78 : vector<16x1xf32> to vector<16x16xf32>
    %80 = arith.subf %76, %79 : vector<16x16xf32>
    %81 = math.exp %80 : vector<16x16xf32>
    %cst_25 = arith.constant dense<0.000000e+00> : vector<16xf32>
    %82 = vector.multi_reduction <add>, %81, %cst_25 [1] : vector<16x16xf32> to vector<16xf32>
    %83 = vector.shape_cast %82 : vector<16xf32> to vector<16x1xf32>
    %cst_26 = arith.constant 1.000000e+00 : f32
    %84 = vector.broadcast %cst_26 : f32 to vector<16x1xf32>
    %85 = arith.divf %84, %83 : vector<16x1xf32>
    %86 = vector.extract_strided_slice %6 {offsets = [0, 64], sizes = [16, 32], strides = [1, 1]} : vector<16x128xbf16> to vector<16x32xbf16>
    %87 = arith.truncf %81 : vector<16x16xf32> to vector<16x16xbf16>
    %cst_27 = arith.constant dense<0.000000e+00> : vector<16x32xf32>
    %88 = tpu.matmul %87, %86, %cst_27 {dimension_numbers = #tpu.dot_dimension_numbers<[1], [0], [0], [1], [0, 0, 1, 1], [], []>} : vector<16x16xbf16>, vector<16x32xbf16>, vector<16x32xf32> -> vector<16x32xf32>
    %89 = vector.broadcast %85 : vector<16x1xf32> to vector<16x32xf32>
    %90 = arith.mulf %88, %89 : vector<16x32xf32>
    %91 = vector.extract_strided_slice %7 {offsets = [0, 7], sizes = [16, 1], strides = [1, 1]} : vector<16x8xf32> to vector<16x1xf32>
    %92 = vector.extract_strided_slice %9 {offsets = [3, 0], sizes = [1, 16], strides = [1, 1]} : vector<4x16xf32> to vector<1x16xf32>
    %93 = vector.shape_cast %92 : vector<1x16xf32> to vector<16xf32>
    %94 = vector.shape_cast %93 : vector<16xf32> to vector<1x16xf32>
    %95 = vector.broadcast %91 : vector<16x1xf32> to vector<16x16xf32>
    %96 = vector.broadcast %94 : vector<1x16xf32> to vector<16x16xf32>
    %97 = arith.addf %95, %96 : vector<16x16xf32>
    %cst_28 = arith.constant 0.000000e+00 : f32
    %98 = vector.broadcast %cst_28 : f32 to vector<16x16xf32>
    %99 = arith.cmpf ogt, %97, %98 : vector<16x16xf32>
    %cst_29 = arith.constant 2.000000e-01 : f32
    %100 = vector.broadcast %cst_29 : f32 to vector<16x16xf32>
    %101 = arith.mulf %100, %97 : vector<16x16xf32>
    %102 = arith.select %99, %97, %101 : vector<16x16xi1>, vector<16x16xf32>
    %103 = arith.addf %102, %0 : vector<16x16xf32>
    %cst_30 = arith.constant dense<0xFF800000> : vector<16xf32>
    %104 = vector.multi_reduction <maximumf>, %103, %cst_30 [1] : vector<16x16xf32> to vector<16xf32>
    %105 = vector.shape_cast %104 : vector<16xf32> to vector<16x1xf32>
    %106 = vector.broadcast %105 : vector<16x1xf32> to vector<16x16xf32>
    %107 = arith.subf %103, %106 : vector<16x16xf32>
    %108 = math.exp %107 : vector<16x16xf32>
    %cst_31 = arith.constant dense<0.000000e+00> : vector<16xf32>
    %109 = vector.multi_reduction <add>, %108, %cst_31 [1] : vector<16x16xf32> to vector<16xf32>
    %110 = vector.shape_cast %109 : vector<16xf32> to vector<16x1xf32>
    %cst_32 = arith.constant 1.000000e+00 : f32
    %111 = vector.broadcast %cst_32 : f32 to vector<16x1xf32>
    %112 = arith.divf %111, %110 : vector<16x1xf32>
    %113 = vector.extract_strided_slice %6 {offsets = [0, 96], sizes = [16, 32], strides = [1, 1]} : vector<16x128xbf16> to vector<16x32xbf16>
    %114 = arith.truncf %108 : vector<16x16xf32> to vector<16x16xbf16>
    %cst_33 = arith.constant dense<0.000000e+00> : vector<16x32xf32>
    %115 = tpu.matmul %114, %113, %cst_33 {dimension_numbers = #tpu.dot_dimension_numbers<[1], [0], [0], [1], [0, 0, 1, 1], [], []>} : vector<16x16xbf16>, vector<16x32xbf16>, vector<16x32xf32> -> vector<16x32xf32>
    %116 = vector.broadcast %112 : vector<16x1xf32> to vector<16x32xf32>
    %117 = arith.mulf %115, %116 : vector<16x32xf32>
    %118 = tpu.concatenate %36, %63, %90, %117 in 1 : vector<16x32xf32>, vector<16x32xf32>, vector<16x32xf32>, vector<16x32xf32> -> vector<16x128xf32>
    %119 = vector.broadcast %4 : vector<1x128xf32> to vector<16x128xf32>
    %120 = arith.addf %118, %119 : vector<16x128xf32>
    %cst_34 = arith.constant 0.000000e+00 : f32
    %121 = vector.broadcast %cst_34 : f32 to vector<16x128xf32>
    %122 = arith.maximumf %120, %121 : vector<16x128xf32>
    %123 = arith.truncf %122 : vector<16x128xf32> to vector<16x128xbf16>
    %c0_35 = arith.constant 0 : index
    %c0_36 = arith.constant 0 : index
    %124 = vector.load %arg7[%c0_35, %c0_36] : memref<128x32xbf16, #tpu.memory_space<vmem>>, vector<128x32xbf16>
    %c0_37 = arith.constant 0 : index
    %c0_38 = arith.constant 0 : index
    %125 = vector.load %arg8[%c0_37, %c0_38] : memref<32x2xbf16, #tpu.memory_space<vmem>>, vector<32x2xbf16>
    %c0_39 = arith.constant 0 : index
    %c0_40 = arith.constant 0 : index
    %126 = vector.load %arg9[%c0_39, %c0_40] : memref<1x32xf32, #tpu.memory_space<vmem>>, vector<1x32xf32>
    %cst_41 = arith.constant dense<0.000000e+00> : vector<16x32xf32>
    %127 = tpu.matmul %123, %124, %cst_41 {dimension_numbers = #tpu.dot_dimension_numbers<[1], [0], [0], [1], [0, 0, 1, 1], [], []>} : vector<16x128xbf16>, vector<128x32xbf16>, vector<16x32xf32> -> vector<16x32xf32>
    %128 = arith.truncf %127 : vector<16x32xf32> to vector<16x32xbf16>
    %cst_42 = arith.constant dense<0.000000e+00> : vector<16x2xf32>
    %129 = tpu.matmul %128, %125, %cst_42 {dimension_numbers = #tpu.dot_dimension_numbers<[1], [0], [0], [1], [0, 0, 1, 1], [], []>} : vector<16x32xbf16>, vector<32x2xbf16>, vector<16x2xf32> -> vector<16x2xf32>
    %130 = vector.extract_strided_slice %129 {offsets = [0, 0], sizes = [16, 1], strides = [1, 1]} : vector<16x2xf32> to vector<16x1xf32>
    %131 = tpu.transpose %130, [1, 0] : vector<16x1xf32> -> vector<1x16xf32>
    %132 = vector.extract_strided_slice %129 {offsets = [0, 1], sizes = [16, 1], strides = [1, 1]} : vector<16x2xf32> to vector<16x1xf32>
    %133 = vector.shape_cast %131 : vector<1x16xf32> to vector<16xf32>
    %134 = vector.shape_cast %133 : vector<16xf32> to vector<1x16xf32>
    %135 = vector.broadcast %132 : vector<16x1xf32> to vector<16x16xf32>
    %136 = vector.broadcast %134 : vector<1x16xf32> to vector<16x16xf32>
    %137 = arith.addf %135, %136 : vector<16x16xf32>
    %cst_43 = arith.constant 0.000000e+00 : f32
    %138 = vector.broadcast %cst_43 : f32 to vector<16x16xf32>
    %139 = arith.cmpf ogt, %137, %138 : vector<16x16xf32>
    %cst_44 = arith.constant 2.000000e-01 : f32
    %140 = vector.broadcast %cst_44 : f32 to vector<16x16xf32>
    %141 = arith.mulf %140, %137 : vector<16x16xf32>
    %142 = arith.select %139, %137, %141 : vector<16x16xi1>, vector<16x16xf32>
    %143 = arith.addf %142, %0 : vector<16x16xf32>
    %cst_45 = arith.constant dense<0xFF800000> : vector<16xf32>
    %144 = vector.multi_reduction <maximumf>, %143, %cst_45 [1] : vector<16x16xf32> to vector<16xf32>
    %145 = vector.shape_cast %144 : vector<16xf32> to vector<16x1xf32>
    %146 = vector.broadcast %145 : vector<16x1xf32> to vector<16x16xf32>
    %147 = arith.subf %143, %146 : vector<16x16xf32>
    %148 = math.exp %147 : vector<16x16xf32>
    %cst_46 = arith.constant dense<0.000000e+00> : vector<16xf32>
    %149 = vector.multi_reduction <add>, %148, %cst_46 [1] : vector<16x16xf32> to vector<16xf32>
    %150 = vector.shape_cast %149 : vector<16xf32> to vector<16x1xf32>
    %cst_47 = arith.constant 1.000000e+00 : f32
    %151 = vector.broadcast %cst_47 : f32 to vector<16x1xf32>
    %152 = arith.divf %151, %150 : vector<16x1xf32>
    %153 = arith.truncf %148 : vector<16x16xf32> to vector<16x16xbf16>
    %cst_48 = arith.constant dense<0.000000e+00> : vector<16x32xf32>
    %154 = tpu.matmul %153, %128, %cst_48 {dimension_numbers = #tpu.dot_dimension_numbers<[1], [0], [0], [1], [0, 0, 1, 1], [], []>} : vector<16x16xbf16>, vector<16x32xbf16>, vector<16x32xf32> -> vector<16x32xf32>
    %155 = vector.broadcast %152 : vector<16x1xf32> to vector<16x32xf32>
    %156 = arith.mulf %154, %155 : vector<16x32xf32>
    %157 = vector.broadcast %126 : vector<1x32xf32> to vector<16x32xf32>
    %158 = arith.addf %156, %157 : vector<16x32xf32>
    %cst_49 = arith.constant 0.000000e+00 : f32
    %159 = vector.broadcast %cst_49 : f32 to vector<16x32xf32>
    %160 = arith.maximumf %158, %159 : vector<16x32xf32>
    %161 = arith.truncf %160 : vector<16x32xf32> to vector<16x32xbf16>
    %c0_50 = arith.constant 0 : index
    %c0_51 = arith.constant 0 : index
    %162 = vector.load %arg10[%c0_50, %c0_51] : memref<32x16xbf16, #tpu.memory_space<vmem>>, vector<32x16xbf16>
    %cst_52 = arith.constant dense<0.000000e+00> : vector<16x16xf32>
    %163 = tpu.matmul %161, %162, %cst_52 {dimension_numbers = #tpu.dot_dimension_numbers<[1], [0], [0], [1], [0, 0, 1, 1], [], []>} : vector<16x32xbf16>, vector<32x16xbf16>, vector<16x16xf32> -> vector<16x16xf32>
    %c0_53 = arith.constant 0 : index
    %c0_54 = arith.constant 0 : index
    %164 = vector.load %arg2[%c0_53, %c0_54] : memref<16x16xbf16, #tpu.memory_space<vmem>>, vector<16x16xbf16>
    %165 = arith.truncf %163 : vector<16x16xf32> to vector<16x16xbf16>
    %cst_55 = arith.constant dense<0.000000e+00> : vector<16x16xf32>
    %166 = tpu.matmul %164, %165, %cst_55 {dimension_numbers = #tpu.dot_dimension_numbers<[1], [0], [0], [1], [0, 0, 1, 1], [], []>} : vector<16x16xbf16>, vector<16x16xbf16>, vector<16x16xf32> -> vector<16x16xf32>
    %c0_56 = arith.constant 0 : index
    %c0_57 = arith.constant 0 : index
    %167 = vector.load %arg11[%c0_56, %c0_57] : memref<1x16xf32, #tpu.memory_space<vmem>>, vector<1x16xf32>
    %168 = vector.broadcast %167 : vector<1x16xf32> to vector<16x16xf32>
    %169 = arith.addf %166, %168 : vector<16x16xf32>
    %cst_58 = arith.constant 0.000000e+00 : f32
    %170 = vector.broadcast %cst_58 : f32 to vector<16x16xf32>
    %171 = arith.maximumf %169, %170 : vector<16x16xf32>
    %172 = arith.truncf %171 : vector<16x16xf32> to vector<16x16xbf16>
    %c0_59 = arith.constant 0 : index
    %c0_60 = arith.constant 0 : index
    %173 = vector.load %arg3[%c0_59, %c0_60] : memref<2x16xbf16, #tpu.memory_space<vmem>>, vector<2x16xbf16>
    %cst_61 = arith.constant dense<0.000000e+00> : vector<2x16xf32>
    %174 = tpu.matmul %173, %172, %cst_61 {dimension_numbers = #tpu.dot_dimension_numbers<[1], [0], [0], [1], [0, 0, 1, 1], [], []>} : vector<2x16xbf16>, vector<16x16xbf16>, vector<2x16xf32> -> vector<2x16xf32>
    %175 = arith.truncf %174 : vector<2x16xf32> to vector<2x16xbf16>
    %c0_62 = arith.constant 0 : index
    %c0_63 = arith.constant 0 : index
    %176 = vector.load %arg12[%c0_62, %c0_63] : memref<16x32xbf16, #tpu.memory_space<vmem>>, vector<16x32xbf16>
    %cst_64 = arith.constant dense<0.000000e+00> : vector<2x32xf32>
    %177 = tpu.matmul %175, %176, %cst_64 {dimension_numbers = #tpu.dot_dimension_numbers<[1], [0], [0], [1], [0, 0, 1, 1], [], []>} : vector<2x16xbf16>, vector<16x32xbf16>, vector<2x32xf32> -> vector<2x32xf32>
    %c0_65 = arith.constant 0 : index
    %c0_66 = arith.constant 0 : index
    %178 = vector.load %arg13[%c0_65, %c0_66] : memref<1x32xf32, #tpu.memory_space<vmem>>, vector<1x32xf32>
    %179 = vector.broadcast %178 : vector<1x32xf32> to vector<2x32xf32>
    %180 = arith.addf %177, %179 : vector<2x32xf32>
    %cst_67 = arith.constant 0.000000e+00 : f32
    %181 = vector.broadcast %cst_67 : f32 to vector<2x32xf32>
    %182 = arith.maximumf %180, %181 : vector<2x32xf32>
    %183 = arith.truncf %182 : vector<2x32xf32> to vector<2x32xbf16>
    %c0_68 = arith.constant 0 : index
    %c0_69 = arith.constant 0 : index
    %184 = vector.load %arg14[%c0_68, %c0_69] : memref<32x16xbf16, #tpu.memory_space<vmem>>, vector<32x16xbf16>
    %cst_70 = arith.constant dense<0.000000e+00> : vector<2x16xf32>
    %185 = tpu.matmul %183, %184, %cst_70 {dimension_numbers = #tpu.dot_dimension_numbers<[1], [0], [0], [1], [0, 0, 1, 1], [], []>} : vector<2x32xbf16>, vector<32x16xbf16>, vector<2x16xf32> -> vector<2x16xf32>
    %c0_71 = arith.constant 0 : index
    %c0_72 = arith.constant 0 : index
    %186 = vector.load %arg15[%c0_71, %c0_72] : memref<1x16xf32, #tpu.memory_space<vmem>>, vector<1x16xf32>
    %187 = vector.broadcast %186 : vector<1x16xf32> to vector<2x16xf32>
    %188 = arith.addf %185, %187 : vector<2x16xf32>
    %cst_73 = arith.constant 0.000000e+00 : f32
    %189 = vector.broadcast %cst_73 : f32 to vector<2x16xf32>
    %190 = arith.maximumf %188, %189 : vector<2x16xf32>
    %191 = arith.truncf %190 : vector<2x16xf32> to vector<2x16xbf16>
    %c0_74 = arith.constant 0 : index
    %c0_75 = arith.constant 0 : index
    %192 = vector.load %arg16[%c0_74, %c0_75] : memref<16x1xbf16, #tpu.memory_space<vmem>>, vector<16x1xbf16>
    %cst_76 = arith.constant dense<0.000000e+00> : vector<2x1xf32>
    %193 = tpu.matmul %191, %192, %cst_76 {dimension_numbers = #tpu.dot_dimension_numbers<[1], [0], [0], [1], [0, 0, 1, 1], [], []>} : vector<2x16xbf16>, vector<16x1xbf16>, vector<2x1xf32> -> vector<2x1xf32>
    %c0_77 = arith.constant 0 : index
    %c0_78 = arith.constant 0 : index
    %194 = vector.load %arg17[%c0_77, %c0_78] : memref<1x1xf32, #tpu.memory_space<vmem>>, vector<1x1xf32>
    %195 = vector.broadcast %194 : vector<1x1xf32> to vector<2x1xf32>
    %196 = arith.addf %193, %195 : vector<2x1xf32>
    %197 = arith.negf %196 : vector<2x1xf32>
    %198 = math.exp %197 : vector<2x1xf32>
    %cst_79 = arith.constant 1.000000e+00 : f32
    %199 = vector.broadcast %cst_79 : f32 to vector<2x1xf32>
    %200 = arith.addf %199, %198 : vector<2x1xf32>
    %201 = arith.divf %199, %200 : vector<2x1xf32>
    %c0_80 = arith.constant 0 : index
    %c0_81 = arith.constant 0 : index
    %202 = vector.load %arg18[%c0_80, %c0_81] : memref<16x16xbf16, #tpu.memory_space<vmem>>, vector<16x16xbf16>
    %cst_82 = arith.constant dense<0.000000e+00> : vector<2x16xf32>
    %203 = tpu.matmul %175, %202, %cst_82 {dimension_numbers = #tpu.dot_dimension_numbers<[1], [0], [0], [1], [0, 0, 1, 1], [], []>} : vector<2x16xbf16>, vector<16x16xbf16>, vector<2x16xf32> -> vector<2x16xf32>
    %c0_83 = arith.constant 0 : index
    %c0_84 = arith.constant 0 : index
    %204 = vector.load %arg19[%c0_83, %c0_84] : memref<1x16xf32, #tpu.memory_space<vmem>>, vector<1x16xf32>
    %205 = vector.broadcast %204 : vector<1x16xf32> to vector<2x16xf32>
    %206 = arith.addf %203, %205 : vector<2x16xf32>
    %207 = math.tanh %206 : vector<2x16xf32>
    %cst_85 = arith.constant 0.000000e+00 : f32
    %208 = vector.broadcast %cst_85 : f32 to vector<2x111xf32>
    %209 = tpu.concatenate %207, %201, %208 in 1 : vector<2x16xf32>, vector<2x1xf32>, vector<2x111xf32> -> vector<2x128xf32>
    %c0_86 = arith.constant 0 : index
    %c0_87 = arith.constant 0 : index
    %210 = vector.load %arg20[%c0_86, %c0_87] : memref<2x128xf32, #tpu.memory_space<vmem>>, vector<2x128xf32>
    tpu.vector_store %arg20[%c0_86, %c0_87], %209 {strides = array<i32>} : memref<2x128xf32, #tpu.memory_space<vmem>>, vector<2x128xf32>,
    return
  }
}

</mosaic_0001>

<llo_original>
// kernel: tpu_custom_call.1
$region0: #{tpu_custom_call.1}
  #allocation0 [shape = 'u32[]', space=smem, size = 0x4, offset = 0x4, fixed_abs, tag = 'smem constant byte address 0x4 - core index']
  #allocation1 [shape = 'u32[144,128]{1,0:T(1,128)}', space=vmem, size = 0x12000, scoped, tag = 'internal scratch']
  #allocation2 [shape = 'f32[1,1]{1,0:T(1,128)S(1)}', space=vmem, size = 0x200, scoped, tag = 'scoped memory for tpu_custom_call.1']
  %s0 = inlined_call_operand.vmem [shape: bf16[16,32], index: 0, kind: input, shape index: {}]
  %s1 = inlined_call_operand.vmem [shape: f32[16,16], index: 1, kind: input, shape index: {}]
  %s2 = inlined_call_operand.vmem [shape: bf16[16,16], index: 2, kind: input, shape index: {}]
  %s3 = inlined_call_operand.vmem [shape: bf16[2,16], index: 3, kind: input, shape index: {}]
  %s4 = inlined_call_operand.vmem [shape: bf16[32,128], index: 4, kind: input, shape index: {}]
  %s5 = inlined_call_operand.vmem [shape: bf16[128,8], index: 5, kind: input, shape index: {}]
  %s6 = inlined_call_operand.vmem [shape: f32[1,128], index: 6, kind: input, shape index: {}]
  %s7 = inlined_call_operand.vmem [shape: bf16[128,32], index: 7, kind: input, shape index: {}]
  %s8 = inlined_call_operand.vmem [shape: bf16[32,2], index: 8, kind: input, shape index: {}]
  %s9 = inlined_call_operand.vmem [shape: f32[1,32], index: 9, kind: input, shape index: {}]
  %s10 = inlined_call_operand.vmem [shape: bf16[32,16], index: 10, kind: input, shape index: {}]
  %s11 = inlined_call_operand.vmem [shape: f32[1,16], index: 11, kind: input, shape index: {}]
  %s12 = inlined_call_operand.vmem [shape: bf16[16,32], index: 12, kind: input, shape index: {}]
  %s13 = inlined_call_operand.vmem [shape: f32[1,32], index: 13, kind: input, shape index: {}]
  %s14 = inlined_call_operand.vmem [shape: bf16[32,16], index: 14, kind: input, shape index: {}]
  %s15 = inlined_call_operand.vmem [shape: f32[1,16], index: 15, kind: input, shape index: {}]
  %s16 = inlined_call_operand.vmem [shape: bf16[16,1], index: 16, kind: input, shape index: {}]
  %s17 = inlined_call_operand.<no memory space> [shape: f32[1,1], index: 17, kind: input, shape index: {}]
  %s18 = inlined_call_operand.vmem [shape: bf16[16,16], index: 18, kind: input, shape index: {}]
  %s19 = inlined_call_operand.vmem [shape: f32[1,16], index: 19, kind: input, shape index: {}]
  %s20 = inlined_call_operand.hbm [shape: f32[2,128], index: 20, kind: output, shape index: {}]
  %s21 = sld [smem:[#allocation0]]
  $region90: #{tpu_custom_call.1} parent=0
    _
  %s23 = ssub.s32 1, %s21
  %s24 = scalar_select 0, %s23, %s21
  %v25 = vstv %s17
  %26 = vst [vmem:[#allocation2] sm:$0x1] %v25
  $region1: #{tpu_custom_call.1} parent=0
    #allocation3 [shape = 'u8[1024]{0}', space=vmem, size = 0x400, scoped, tag = 'output window, operand 0, single buffered']
    #allocation4 [shape = 's32[1]{0}', space=sflag, size = 0x4, scoped, tag = 'scoped memory for tpu_custom_call.1']
    %27 = vsyncpa [#allocation4], 0
    // Predicated region
    $region2: #{tpu_custom_call.1} parent=1 // pred_check
      _
    $region3: #{tpu_custom_call.1} parent=1 // pred_check_branch
      %29 = sbr.rel (0) target = $region5
    $region4: #{tpu_custom_call.1} parent=1 // pred_region
      _
    $region5: #{tpu_custom_call.1} parent=1 // pred_fallthru
      _
    // Predicated region
    $region6: #{tpu_custom_call.1} parent=1 // pred_check
      _
    $region7: #{tpu_custom_call.1} parent=1 // pred_check_branch
      %31 = sbr.rel (0) target = $region9
    $region8: #{tpu_custom_call.1} parent=1 // pred_region
      _
    $region9: #{tpu_custom_call.1} parent=1 // pred_fallthru
      _
    // Predicated region
    $region10: #{tpu_custom_call.1} parent=1 // pred_check
      _
    $region11: #{tpu_custom_call.1} parent=1 // pred_check_branch
      %33 = sbr.rel (0) target = $region13
    $region12: #{tpu_custom_call.1} parent=1 // pred_region
      _
    $region13: #{tpu_custom_call.1} parent=1 // pred_fallthru
      _
    // Predicated region
    $region14: #{tpu_custom_call.1} parent=1 // pred_check
      _
    $region15: #{tpu_custom_call.1} parent=1 // pred_check_branch
      %35 = sbr.rel (0) target = $region17
    $region16: #{tpu_custom_call.1} parent=1 // pred_region
      _
    $region17: #{tpu_custom_call.1} parent=1 // pred_fallthru
      _
    // Predicated region
    $region18: #{tpu_custom_call.1} parent=1 // pred_check
      _
    $region19: #{tpu_custom_call.1} parent=1 // pred_check_branch
      %37 = sbr.rel (0) target = $region21
    $region20: #{tpu_custom_call.1} parent=1 // pred_region
      _
    $region21: #{tpu_custom_call.1} parent=1 // pred_fallthru
      _
    // Predicated region
    $region22: #{tpu_custom_call.1} parent=1 // pred_check
      _
    $region23: #{tpu_custom_call.1} parent=1 // pred_check_branch
      %39 = sbr.rel (0) target = $region25
    $region24: #{tpu_custom_call.1} parent=1 // pred_region
      _
    $region25: #{tpu_custom_call.1} parent=1 // pred_fallthru
      _
    // Predicated region
    $region26: #{tpu_custom_call.1} parent=1 // pred_check
      _
    $region27: #{tpu_custom_call.1} parent=1 // pred_check_branch
      %41 = sbr.rel (0) target = $region29
    $region28: #{tpu_custom_call.1} parent=1 // pred_region
      _
    $region29: #{tpu_custom_call.1} parent=1 // pred_fallthru
      _
    // Predicated region
    $region30: #{tpu_custom_call.1} parent=1 // pred_check
      _
    $region31: #{tpu_custom_call.1} parent=1 // pred_check_branch
      %43 = sbr.rel (0) target = $region33
    $region32: #{tpu_custom_call.1} parent=1 // pred_region
      _
    $region33: #{tpu_custom_call.1} parent=1 // pred_fallthru
      _
    // Predicated region
    $region34: #{tpu_custom_call.1} parent=1 // pred_check
      _
    $region35: #{tpu_custom_call.1} parent=1 // pred_check_branch
      %45 = sbr.rel (0) target = $region37
    $region36: #{tpu_custom_call.1} parent=1 // pred_region
      _
    $region37: #{tpu_custom_call.1} parent=1 // pred_fallthru
      _
    // Predicated region
    $region38: #{tpu_custom_call.1} parent=1 // pred_check
      _
    $region39: #{tpu_custom_call.1} parent=1 // pred_check_branch
      %47 = sbr.rel (0) target = $region41
    $region40: #{tpu_custom_call.1} parent=1 // pred_region
      _
    $region41: #{tpu_custom_call.1} parent=1 // pred_fallthru
      _
    // Predicated region
    $region42: #{tpu_custom_call.1} parent=1 // pred_check
      _
    $region43: #{tpu_custom_call.1} parent=1 // pred_check_branch
      %49 = sbr.rel (0) target = $region45
    $region44: #{tpu_custom_call.1} parent=1 // pred_region
      _
    $region45: #{tpu_custom_call.1} parent=1 // pred_fallthru
      _
    // Predicated region
    $region46: #{tpu_custom_call.1} parent=1 // pred_check
      _
    $region47: #{tpu_custom_call.1} parent=1 // pred_check_branch
      %51 = sbr.rel (0) target = $region49
    $region48: #{tpu_custom_call.1} parent=1 // pred_region
      _
    $region49: #{tpu_custom_call.1} parent=1 // pred_fallthru
      _
    // Predicated region
    $region50: #{tpu_custom_call.1} parent=1 // pred_check
      _
    $region51: #{tpu_custom_call.1} parent=1 // pred_check_branch
      %53 = sbr.rel (0) target = $region53
    $region52: #{tpu_custom_call.1} parent=1 // pred_region
      _
    $region53: #{tpu_custom_call.1} parent=1 // pred_fallthru
      _
    // Predicated region
    $region54: #{tpu_custom_call.1} parent=1 // pred_check
      _
    $region55: #{tpu_custom_call.1} parent=1 // pred_check_branch
      %55 = sbr.rel (0) target = $region57
    $region56: #{tpu_custom_call.1} parent=1 // pred_region
      _
    $region57: #{tpu_custom_call.1} parent=1 // pred_fallthru
      _
    // Predicated region
    $region58: #{tpu_custom_call.1} parent=1 // pred_check
      _
    $region59: #{tpu_custom_call.1} parent=1 // pred_check_branch
      %57 = sbr.rel (0) target = $region61
    $region60: #{tpu_custom_call.1} parent=1 // pred_region
      _
    $region61: #{tpu_custom_call.1} parent=1 // pred_fallthru
      _
    // Predicated region
    $region62: #{tpu_custom_call.1} parent=1 // pred_check
      _
    $region63: #{tpu_custom_call.1} parent=1 // pred_check_branch
      %59 = sbr.rel (0) target = $region65
    $region64: #{tpu_custom_call.1} parent=1 // pred_region
      _
    $region65: #{tpu_custom_call.1} parent=1 // pred_fallthru
      _
    // Predicated region
    $region66: #{tpu_custom_call.1} parent=1 // pred_check
      _
    $region67: #{tpu_custom_call.1} parent=1 // pred_check_branch
      %61 = sbr.rel (0) target = $region69
    $region68: #{tpu_custom_call.1} parent=1 // pred_region
      _
    $region69: #{tpu_custom_call.1} parent=1 // pred_fallthru
      _
    // Predicated region
    $region70: #{tpu_custom_call.1} parent=1 // pred_check
      _
    $region71: #{tpu_custom_call.1} parent=1 // pred_check_branch
      %63 = sbr.rel (0) target = $region73
    $region72: #{tpu_custom_call.1} parent=1 // pred_region
      _
    $region73: #{tpu_custom_call.1} parent=1 // pred_fallthru
      _
    // Predicated region
    $region74: #{tpu_custom_call.1} parent=1 // pred_check
      _
    $region75: #{tpu_custom_call.1} parent=1 // pred_check_branch
      %65 = sbr.rel (0) target = $region77
    $region76: #{tpu_custom_call.1} parent=1 // pred_region
      _
    $region77: #{tpu_custom_call.1} parent=1 // pred_fallthru
      _
    // Predicated region
    $region78: #{tpu_custom_call.1} parent=1 // pred_check
      _
    $region79: #{tpu_custom_call.1} parent=1 // pred_check_branch
      %67 = sbr.rel (0) target = $region81
    $region80: #{tpu_custom_call.1} parent=1 // pred_region
      _
    $region81: #{tpu_custom_call.1} parent=1 // pred_fallthru
      _
    %v69 = vld [vmem:[%s1] sm:$0xff]
    %v70 = vld [vmem:[%s1 + $0x8] sm:$0xff]
    %v71 = vld [vmem:[%s0] sm:$0xf]
    %v72 = vld [vmem:[%s0 + $0x4] sm:$0xf]
    %v73 = vld [vmem:[%s4] sm:$0xf]
    %v74 = vld [vmem:[%s4 + $0x4] sm:$0xf]
    %v75 = vld [vmem:[%s4 + $0x8] sm:$0xf]
    %v76 = vld [vmem:[%s4 + $0xc] sm:$0xf]
    %v77 = vld [vmem:[%s5] sm:$0xf]
    %v78 = vld [vmem:[%s5 + $0x4] sm:$0xf]
    %v79 = vld [vmem:[%s5 + $0x8] sm:$0xf]
    %v80 = vld [vmem:[%s5 + $0xc] sm:$0xf]
    %v81 = vld [vmem:[%s5 + $0x10] sm:$0xf]
    %v82 = vld [vmem:[%s5 + $0x14] sm:$0xf]
    %v83 = vld [vmem:[%s5 + $0x18] sm:$0xf]
    %v84 = vld [vmem:[%s5 + $0x1c] sm:$0xf]
    %v85 = vld [vmem:[%s5 + $0x20] sm:$0xf]
    %v86 = vld [vmem:[%s5 + $0x24] sm:$0xf]
    %v87 = vld [vmem:[%s5 + $0x28] sm:$0xf]
    %v88 = vld [vmem:[%s5 + $0x2c] sm:$0xf]
    %v89 = vld [vmem:[%s5 + $0x30] sm:$0xf]
    %v90 = vld [vmem:[%s5 + $0x34] sm:$0xf]
    %v91 = vld [vmem:[%s5 + $0x38] sm:$0xf]
    %v92 = vld [vmem:[%s5 + $0x3c] sm:$0xf]
    %v93 = vld [vmem:[%s6] sm:$0x1]
    %v96 = vunpack.c.l.b16 %v71
    %v97 = vunpack.c.l.b16 %v72
    %v98 = vpack.c.b16 %v97, %v96
    %v103 = vunpack.c.l.b16 %v73
    %v104 = vunpack.c.l.b16 %v74
    %v105 = vunpack.c.l.b16 %v75
    %v106 = vunpack.c.l.b16 %v76
    %v107 = vpack.c.b16 %v104, %v103
    %v108 = vpack.c.b16 %v106, %v105
    %vm111 = vcmask 261120
    %v113 = vsel %vm111, %v98, 0
    %115 = vmatprep.subr.bf16.mxu0 0
    %116 = vmatpush1.bf16.msra.mxu0 0
    %117 = vmatprep.subr.bf16.mxu0 0
    %118 = vmatpush1.bf16.msra.mxu0 0
    %119 = vmatprep.subr.bf16.mxu0 0
    %120 = vmatpush1.bf16.msra.mxu0 0
    %121 = vmatprep.subr.bf16.mxu0 0
    %122 = vmatpush1.bf16.msra.mxu0 0
    %123 = vmatprep.subr.bf16.mxu0 0
    %124 = vmatpush1.bf16.msra.mxu0 0
    %125 = vmatprep.subr.bf16.mxu0 0
    %126 = vmatpush1.bf16.msra.mxu0 0
    %127 = vmatprep.subr.bf16.mxu0 0
    %128 = vmatpush1.bf16.msra.mxu0 %v108
    %129 = vmatprep.subr.bf16.mxu0 0
    %130 = vmatpush1.bf16.msra.mxu0 %v107
    %131 = vmatprep.subr.bf16.mxu0 0
    %132 = vmatpush2.bf16.msra.mxu0 0
    %133 = vmatprep.subr.bf16.mxu0 0
    %134 = vmatpush2.bf16.msra.mxu0 0
    %135 = vmatprep.subr.bf16.mxu0 0
    %136 = vmatpush2.bf16.msra.mxu0 0
    %137 = vmatprep.subr.bf16.mxu0 0
    %138 = vmatpush2.bf16.msra.mxu0 0
    %139 = vmatprep.subr.bf16.mxu0 0
    %140 = vmatpush2.bf16.msra.mxu0 0
    %141 = vmatprep.subr.bf16.mxu0 0
    %142 = vmatpush2.bf16.msra.mxu0 0
    %143 = vmatprep.subr.bf16.mxu0 0
    %144 = vmatpush2.bf16.msra.mxu0 0
    %145 = vmatprep.subr.bf16.mxu0 0
    %146 = vmatpush2.bf16.msra.mxu0 0
    %147 = vmatprep.mubr.bf16.mxu0 0
    %148 = vmatmul.mubr.bf16.gmra.mxu0 %v113
    %v149 = vpop.f32.mrf.mxu0
    %v150 = vadd.f32 0.0, %v149
    %v151 = vpop.f32.mrf.mxu0
    %v152 = vpop.f32.mrf.mxu0
    %v153 = vadd.f32 0.0, %v152
    %v154 = vpop.f32.mrf.mxu0
    %155 = vdwg.mxu0
    %v156 = vpack.c.bf16 %v153, %v150
    %v173 = vunpack.c.l.b16 %v77
    %v174 = vunpack.c.l.b16 %v78
    %v175 = vunpack.c.l.b16 %v79
    %v176 = vunpack.c.l.b16 %v80
    %v177 = vunpack.c.l.b16 %v81
    %v178 = vunpack.c.l.b16 %v82
    %v179 = vunpack.c.l.b16 %v83
    %v180 = vunpack.c.l.b16 %v84
    %v181 = vunpack.c.l.b16 %v85
    %v182 = vunpack.c.l.b16 %v86
    %v183 = vunpack.c.l.b16 %v87
    %v184 = vunpack.c.l.b16 %v88
    %v185 = vunpack.c.l.b16 %v89
    %v186 = vunpack.c.l.b16 %v90
    %v187 = vunpack.c.l.b16 %v91
    %v188 = vunpack.c.l.b16 %v92
    %v189 = vpack.c.b16 %v174, %v173
    %v190 = vpack.c.b16 %v176, %v175
    %v191 = vpack.c.b16 %v178, %v177
    %v192 = vpack.c.b16 %v180, %v179
    %v193 = vpack.c.b16 %v182, %v181
    %v194 = vpack.c.b16 %v184, %v183
    %v195 = vpack.c.b16 %v186, %v185
    %v196 = vpack.c.b16 %v188, %v187
    %205 = vmatprep.subr.bf16.mxu0 0
    %206 = vmatpush1.bf16.msra.mxu0 %v196
    %207 = vmatprep.subr.bf16.mxu0 0
    %208 = vmatpush1.bf16.msra.mxu0 %v195
    %209 = vmatprep.subr.bf16.mxu0 0
    %210 = vmatpush1.bf16.msra.mxu0 %v194
    %211 = vmatprep.subr.bf16.mxu0 0
    %212 = vmatpush1.bf16.msra.mxu0 %v193
    %213 = vmatprep.subr.bf16.mxu0 0
    %214 = vmatpush1.bf16.msra.mxu0 %v192
    %215 = vmatprep.subr.bf16.mxu0 0
    %216 = vmatpush1.bf16.msra.mxu0 %v191
    %217 = vmatprep.subr.bf16.mxu0 0
    %218 = vmatpush1.bf16.msra.mxu0 %v190
    %219 = vmatprep.subr.bf16.mxu0 0
    %220 = vmatpush1.bf16.msra.mxu0 %v189
    %221 = vmatprep.subr.bf16.mxu0 0
    %222 = vmatpush2.bf16.msra.mxu0 0
    %223 = vmatprep.subr.bf16.mxu0 0
    %224 = vmatpush2.bf16.msra.mxu0 0
    %225 = vmatprep.subr.bf16.mxu0 0
    %226 = vmatpush2.bf16.msra.mxu0 0
    %227 = vmatprep.subr.bf16.mxu0 0
    %228 = vmatpush2.bf16.msra.mxu0 0
    %229 = vmatprep.subr.bf16.mxu0 0
    %230 = vmatpush2.bf16.msra.mxu0 0
    %231 = vmatprep.subr.bf16.mxu0 0
    %232 = vmatpush2.bf16.msra.mxu0 0
    %233 = vmatprep.subr.bf16.mxu0 0
    %234 = vmatpush2.bf16.msra.mxu0 0
    %235 = vmatprep.subr.bf16.mxu0 0
    %236 = vmatpush2.bf16.msra.mxu0 0
    %237 = vmatprep.mubr.bf16.mxu0 0
    %238 = vmatmul.mubr.bf16.gmra.mxu0 %v156
    %v239 = vpop.f32.mrf.mxu0
    %v240 = vadd.f32 0.0, %v239
    %v241 = vpop.f32.mrf.mxu0
    %v242 = vpop.f32.mrf.mxu0
    %v243 = vadd.f32 0.0, %v242
    %v244 = vpop.f32.mrf.mxu0
    %245 = vdwg.mxu0
    %246 = vxpose.xlu0.b32.start [1/16] %v240, 128
    %247 = vxpose.xlu0.b32.cont [2/16] %v243, 128
    %248 = vxpose.xlu0.b32.cont [3/16] 0.0, 128
    %249 = vxpose.xlu0.b32.cont [4/16] 0.0, 128
    %250 = vxpose.xlu0.b32.cont [5/16] 0.0, 128
    %251 = vxpose.xlu0.b32.cont [6/16] 0.0, 128
    %252 = vxpose.xlu0.b32.cont [7/16] 0.0, 128
    %253 = vxpose.xlu0.b32.cont [8/16] 0.0, 128
    %254 = vxpose.xlu0.b32.cont [9/16] 0.0, 128
    %255 = vxpose.xlu0.b32.cont [10/16] 0.0, 128
    %256 = vxpose.xlu0.b32.cont [11/16] 0.0, 128
    %257 = vxpose.xlu0.b32.cont [12/16] 0.0, 128
    %258 = vxpose.xlu0.b32.cont [13/16] 0.0, 128
    %259 = vxpose.xlu0.b32.cont [14/16] 0.0, 128
    %260 = vxpose.xlu0.b32.cont [15/16] 0.0, 128
    %261 = vxpose.xlu0.b32.end [16/16] 0.0, 128
    %v262 = vpop.trf.xlu0
    %v263 = vpop.trf.xlu0
    %v264 = vpop.trf.xlu0
    %v265 = vpop.trf.xlu0
    %v266 = vpop.trf.xlu0
    %v267 = vpop.trf.xlu0
    %v268 = vpop.trf.xlu0
    %v269 = vpop.trf.xlu0
    %v270 = vpop.trf.xlu0
    %v271 = vpop.trf.xlu0
    %v272 = vpop.trf.xlu0
    %v273 = vpop.trf.xlu0
    %v274 = vpop.trf.xlu0
    %v275 = vpop.trf.xlu0
    %v276 = vpop.trf.xlu0
    %v277 = vpop.trf.xlu0
    %279 = vset.pattern.permute.xlu0 4
    %280 = vperm.xlu0 %279, %v240
    %v281 = vpop.permute.xlu0 %280
    %284 = vset.pattern.permute.xlu0 4
    %285 = vperm.xlu0 %284, %v243
    %v286 = vpop.permute.xlu0 %285
    %v288 = vlaneseq
    %v289 = vshrl.u32 %v288, 7
    %v290 = vsub.s32 0, %v289
    %v291 = vrot.slane %v262, %v290
    %v292 = vadd.f32 %v281, %v291
    %v293 = vadd.f32 %v286, %v291
    %vm294 = vcmp.gt.f32.partialorder %v292, 0.0
    %vm295 = vcmp.gt.f32.partialorder %v293, 0.0
    %v296 = vmul.f32 %v292, 0.2
    %v297 = vmul.f32 %v293, 0.2
    %v298 = vsel %vm294, %v292, %v296
    %v299 = vsel %vm295, %v293, %v297
    %v300 = vadd.f32 %v298, %v69
    %v301 = vadd.f32 %v299, %v70
    %vm302 = vcmask 130048
    %v303 = vsel %vm302, %v300, -inf
    %304 = vmax.xlane.f32.xlu0 %v303
    %v305 = vpop.xlane.xlu0 %304
    %v306 = vsel %vm302, %v301, -inf
    %307 = vmax.xlane.f32.xlu0 %v306
    %v308 = vpop.xlane.xlu0 %307
    %v309 = vsub.f32 %v300, %v305
    %v310 = vsub.f32 %v301, %v308
    %v311 = vmul.f32 %v309, 1.442695
    %v312 = vpow.pop %v311
    %v313 = vmul.f32 %v310, 1.442695
    %v314 = vpow.pop %v313
    %v315 = vsel %vm302, %v312, 0.0
    %316 = vadd.xlane.f32.xlu0 %v315
    %v317 = vpop.xlane.xlu0 %316
    %v318 = vsel %vm302, %v314, 0.0
    %319 = vadd.xlane.f32.xlu0 %v318
    %v320 = vpop.xlane.xlu0 %319
    %v321 = vrcp.pop %v317
    %v322 = vmul.f32 1.0, %v321
    %v323 = vrcp.pop %v320
    %v324 = vmul.f32 1.0, %v323
    %v325 = vpack.c.bf16 %v314, %v312
    %v327 = vsel %vm302, %v325, 0
    %329 = vmatprep.subr.bf16.mxu0 0
    %330 = vmatpush1.bf16.msra.mxu0 0
    %331 = vmatprep.subr.bf16.mxu0 0
    %332 = vmatpush1.bf16.msra.mxu0 0
    %333 = vmatprep.subr.bf16.mxu0 0
    %334 = vmatpush1.bf16.msra.mxu0 0
    %335 = vmatprep.subr.bf16.mxu0 0
    %336 = vmatpush1.bf16.msra.mxu0 0
    %337 = vmatprep.subr.bf16.mxu0 0
    %338 = vmatpush1.bf16.msra.mxu0 0
    %339 = vmatprep.subr.bf16.mxu0 0
    %340 = vmatpush1.bf16.msra.mxu0 0
    %341 = vmatprep.subr.bf16.mxu0 0
    %342 = vmatpush1.bf16.msra.mxu0 0
    %343 = vmatprep.subr.bf16.mxu0 0
    %344 = vmatpush1.bf16.msra.mxu0 %v156
    %345 = vmatprep.subr.bf16.mxu0 0
    %346 = vmatpush2.bf16.msra.mxu0 0
    %347 = vmatprep.subr.bf16.mxu0 0
    %348 = vmatpush2.bf16.msra.mxu0 0
    %349 = vmatprep.subr.bf16.mxu0 0
    %350 = vmatpush2.bf16.msra.mxu0 0
    %351 = vmatprep.subr.bf16.mxu0 0
    %352 = vmatpush2.bf16.msra.mxu0 0
    %353 = vmatprep.subr.bf16.mxu0 0
    %354 = vmatpush2.bf16.msra.mxu0 0
    %355 = vmatprep.subr.bf16.mxu0 0
    %356 = vmatpush2.bf16.msra.mxu0 0
    %357 = vmatprep.subr.bf16.mxu0 0
    %358 = vmatpush2.bf16.msra.mxu0 0
    %359 = vmatprep.subr.bf16.mxu0 0
    %360 = vmatpush2.bf16.msra.mxu0 0
    %361 = vmatprep.mubr.bf16.mxu0 0
    %362 = vmatmul.mubr.bf16.gmra.mxu0 %v327
    %v363 = vpop.f32.mrf.mxu0
    %v364 = vadd.f32 0.0, %v363
    %v365 = vpop.f32.mrf.mxu0
    %v366 = vpop.f32.mrf.mxu0
    %v367 = vadd.f32 0.0, %v366
    %v368 = vpop.f32.mrf.mxu0
    %369 = vdwg.mxu0
    %v370 = vmul.f32 %v364, %v322
    %v371 = vmul.f32 %v367, %v324
    %372 = vset.pattern.permute.xlu0 5
    %373 = vperm.xlu0 %372, %v240
    %v374 = vpop.permute.xlu0 %373
    %376 = vset.pattern.permute.xlu0 5
    %377 = vperm.xlu0 %376, %v243
    %v378 = vpop.permute.xlu0 %377
    %v380 = vlaneseq
    %v381 = vshrl.u32 %v380, 7
    %v382 = vsub.s32 1, %v381
    %v383 = vrot.slane %v262, %v382
    %v384 = vadd.f32 %v374, %v383
    %v385 = vadd.f32 %v378, %v383
    %vm386 = vcmp.gt.f32.partialorder %v384, 0.0
    %vm387 = vcmp.gt.f32.partialorder %v385, 0.0
    %v388 = vmul.f32 %v384, 0.2
    %v389 = vmul.f32 %v385, 0.2
    %v390 = vsel %vm386, %v384, %v388
    %v391 = vsel %vm387, %v385, %v389
    %v392 = vadd.f32 %v390, %v69
    %v393 = vadd.f32 %v391, %v70
    %v394 = vsel %vm302, %v392, -inf
    %395 = vmax.xlane.f32.xlu0 %v394
    %v396 = vpop.xlane.xlu0 %395
    %v397 = vsel %vm302, %v393, -inf
    %398 = vmax.xlane.f32.xlu0 %v397
    %v399 = vpop.xlane.xlu0 %398
    %v400 = vsub.f32 %v392, %v396
    %v401 = vsub.f32 %v393, %v399
    %v402 = vmul.f32 %v400, 1.442695
    %v403 = vpow.pop %v402
    %v404 = vmul.f32 %v401, 1.442695
    %v405 = vpow.pop %v404
    %v406 = vsel %vm302, %v403, 0.0
    %407 = vadd.xlane.f32.xlu0 %v406
    %v408 = vpop.xlane.xlu0 %407
    %v409 = vsel %vm302, %v405, 0.0
    %410 = vadd.xlane.f32.xlu0 %v409
    %v411 = vpop.xlane.xlu0 %410
    %v412 = vrcp.pop %v408
    %v413 = vmul.f32 1.0, %v412
    %v414 = vrcp.pop %v411
    %v415 = vmul.f32 1.0, %v414
    %v416 = vpack.c.bf16 %v405, %v403
    %418 = vrot.lane.b32.xlu0 %v156, 96
    %v419 = vpop.permute.xlu0 %418
    %v422 = vsel %vm302, %v416, 0
    %424 = vmatprep.subr.bf16.mxu0 0
    %425 = vmatpush1.bf16.msra.mxu0 0
    %426 = vmatprep.subr.bf16.mxu0 0
    %427 = vmatpush1.bf16.msra.mxu0 0
    %428 = vmatprep.subr.bf16.mxu0 0
    %429 = vmatpush1.bf16.msra.mxu0 0
    %430 = vmatprep.subr.bf16.mxu0 0
    %431 = vmatpush1.bf16.msra.mxu0 0
    %432 = vmatprep.subr.bf16.mxu0 0
    %433 = vmatpush1.bf16.msra.mxu0 0
    %434 = vmatprep.subr.bf16.mxu0 0
    %435 = vmatpush1.bf16.msra.mxu0 0
    %436 = vmatprep.subr.bf16.mxu0 0
    %437 = vmatpush1.bf16.msra.mxu0 0
    %438 = vmatprep.subr.bf16.mxu0 0
    %439 = vmatpush1.bf16.msra.mxu0 %v419
    %440 = vmatprep.subr.bf16.mxu0 0
    %441 = vmatpush2.bf16.msra.mxu0 0
    %442 = vmatprep.subr.bf16.mxu0 0
    %443 = vmatpush2.bf16.msra.mxu0 0
    %444 = vmatprep.subr.bf16.mxu0 0
    %445 = vmatpush2.bf16.msra.mxu0 0
    %446 = vmatprep.subr.bf16.mxu0 0
    %447 = vmatpush2.bf16.msra.mxu0 0
    %448 = vmatprep.subr.bf16.mxu0 0
    %449 = vmatpush2.bf16.msra.mxu0 0
    %450 = vmatprep.subr.bf16.mxu0 0
    %451 = vmatpush2.bf16.msra.mxu0 0
    %452 = vmatprep.subr.bf16.mxu0 0
    %453 = vmatpush2.bf16.msra.mxu0 0
    %454 = vmatprep.subr.bf16.mxu0 0
    %455 = vmatpush2.bf16.msra.mxu0 0
    %456 = vmatprep.mubr.bf16.mxu0 0
    %457 = vmatmul.mubr.bf16.gmra.mxu0 %v422
    %v458 = vpop.f32.mrf.mxu0
    %v459 = vadd.f32 0.0, %v458
    %v460 = vpop.f32.mrf.mxu0
    %v461 = vpop.f32.mrf.mxu0
    %v462 = vadd.f32 0.0, %v461
    %v463 = vpop.f32.mrf.mxu0
    %464 = vdwg.mxu0
    %v465 = vmul.f32 %v459, %v413
    %v466 = vmul.f32 %v462, %v415
    %467 = vset.pattern.permute.xlu0 6
    %468 = vperm.xlu0 %467, %v240
    %v469 = vpop.permute.xlu0 %468
    %471 = vset.pattern.permute.xlu0 6
    %472 = vperm.xlu0 %471, %v243
    %v473 = vpop.permute.xlu0 %472
    %v475 = vlaneseq
    %v476 = vshrl.u32 %v475, 7
    %v477 = vsub.s32 2, %v476
    %v478 = vrot.slane %v262, %v477
    %v479 = vadd.f32 %v469, %v478
    %v480 = vadd.f32 %v473, %v478
    %vm481 = vcmp.gt.f32.partialorder %v479, 0.0
    %vm482 = vcmp.gt.f32.partialorder %v480, 0.0
    %v483 = vmul.f32 %v479, 0.2
    %v484 = vmul.f32 %v480, 0.2
    %v485 = vsel %vm481, %v479, %v483
    %v486 = vsel %vm482, %v480, %v484
    %v487 = vadd.f32 %v485, %v69
    %v488 = vadd.f32 %v486, %v70
    %v489 = vsel %vm302, %v487, -inf
    %490 = vmax.xlane.f32.xlu0 %v489
    %v491 = vpop.xlane.xlu0 %490
    %v492 = vsel %vm302, %v488, -inf
    %493 = vmax.xlane.f32.xlu0 %v492
    %v494 = vpop.xlane.xlu0 %493
    %v495 = vsub.f32 %v487, %v491
    %v496 = vsub.f32 %v488, %v494
    %v497 = vmul.f32 %v495, 1.442695
    %v498 = vpow.pop %v497
    %v499 = vmul.f32 %v496, 1.442695
    %v500 = vpow.pop %v499
    %v501 = vsel %vm302, %v498, 0.0
    %502 = vadd.xlane.f32.xlu0 %v501
    %v503 = vpop.xlane.xlu0 %502
    %v504 = vsel %vm302, %v500, 0.0
    %505 = vadd.xlane.f32.xlu0 %v504
    %v506 = vpop.xlane.xlu0 %505
    %v507 = vrcp.pop %v503
    %v508 = vmul.f32 1.0, %v507
    %v509 = vrcp.pop %v506
    %v510 = vmul.f32 1.0, %v509
    %v511 = vpack.c.bf16 %v500, %v498
    %512 = vrot.lane.b32.xlu0 %v156, 64
    %v513 = vpop.permute.xlu0 %512
    %v516 = vsel %vm302, %v511, 0
    %518 = vmatprep.subr.bf16.mxu0 0
    %519 = vmatpush1.bf16.msra.mxu0 0
    %520 = vmatprep.subr.bf16.mxu0 0
    %521 = vmatpush1.bf16.msra.mxu0 0
    %522 = vmatprep.subr.bf16.mxu0 0
    %523 = vmatpush1.bf16.msra.mxu0 0
    %524 = vmatprep.subr.bf16.mxu0 0
    %525 = vmatpush1.bf16.msra.mxu0 0
    %526 = vmatprep.subr.bf16.mxu0 0
    %527 = vmatpush1.bf16.msra.mxu0 0
    %528 = vmatprep.subr.bf16.mxu0 0
    %529 = vmatpush1.bf16.msra.mxu0 0
    %530 = vmatprep.subr.bf16.mxu0 0
    %531 = vmatpush1.bf16.msra.mxu0 0
    %532 = vmatprep.subr.bf16.mxu0 0
    %533 = vmatpush1.bf16.msra.mxu0 %v513
    %534 = vmatprep.subr.bf16.mxu0 0
    %535 = vmatpush2.bf16.msra.mxu0 0
    %536 = vmatprep.subr.bf16.mxu0 0
    %537 = vmatpush2.bf16.msra.mxu0 0
    %538 = vmatprep.subr.bf16.mxu0 0
    %539 = vmatpush2.bf16.msra.mxu0 0
    %540 = vmatprep.subr.bf16.mxu0 0
    %541 = vmatpush2.bf16.msra.mxu0 0
    %542 = vmatprep.subr.bf16.mxu0 0
    %543 = vmatpush2.bf16.msra.mxu0 0
    %544 = vmatprep.subr.bf16.mxu0 0
    %545 = vmatpush2.bf16.msra.mxu0 0
    %546 = vmatprep.subr.bf16.mxu0 0
    %547 = vmatpush2.bf16.msra.mxu0 0
    %548 = vmatprep.subr.bf16.mxu0 0
    %549 = vmatpush2.bf16.msra.mxu0 0
    %550 = vmatprep.mubr.bf16.mxu0 0
    %551 = vmatmul.mubr.bf16.gmra.mxu0 %v516
    %v552 = vpop.f32.mrf.mxu0
    %v553 = vadd.f32 0.0, %v552
    %v554 = vpop.f32.mrf.mxu0
    %v555 = vpop.f32.mrf.mxu0
    %v556 = vadd.f32 0.0, %v555
    %v557 = vpop.f32.mrf.mxu0
    %558 = vdwg.mxu0
    %v559 = vmul.f32 %v553, %v508
    %v560 = vmul.f32 %v556, %v510
    %561 = vset.pattern.permute.xlu0 7
    %562 = vperm.xlu0 %561, %v240
    %v563 = vpop.permute.xlu0 %562
    %565 = vset.pattern.permute.xlu0 7
    %566 = vperm.xlu0 %565, %v243
    %v567 = vpop.permute.xlu0 %566
    %v569 = vlaneseq
    %v570 = vshrl.u32 %v569, 7
    %v571 = vsub.s32 3, %v570
    %v572 = vrot.slane %v262, %v571
    %v573 = vadd.f32 %v563, %v572
    %v574 = vadd.f32 %v567, %v572
    %vm575 = vcmp.gt.f32.partialorder %v573, 0.0
    %vm576 = vcmp.gt.f32.partialorder %v574, 0.0
    %v577 = vmul.f32 %v573, 0.2
    %v578 = vmul.f32 %v574, 0.2
    %v579 = vsel %vm575, %v573, %v577
    %v580 = vsel %vm576, %v574, %v578
    %v581 = vadd.f32 %v579, %v69
    %v582 = vadd.f32 %v580, %v70
    %v583 = vsel %vm302, %v581, -inf
    %584 = vmax.xlane.f32.xlu0 %v583
    %v585 = vpop.xlane.xlu0 %584
    %v586 = vsel %vm302, %v582, -inf
    %587 = vmax.xlane.f32.xlu0 %v586
    %v588 = vpop.xlane.xlu0 %587
    %v589 = vsub.f32 %v581, %v585
    %v590 = vsub.f32 %v582, %v588
    %v591 = vmul.f32 %v589, 1.442695
    %v592 = vpow.pop %v591
    %v593 = vmul.f32 %v590, 1.442695
    %v594 = vpow.pop %v593
    %v595 = vsel %vm302, %v592, 0.0
    %596 = vadd.xlane.f32.xlu0 %v595
    %v597 = vpop.xlane.xlu0 %596
    %v598 = vsel %vm302, %v594, 0.0
    %599 = vadd.xlane.f32.xlu0 %v598
    %v600 = vpop.xlane.xlu0 %599
    %v601 = vrcp.pop %v597
    %v602 = vmul.f32 1.0, %v601
    %v603 = vrcp.pop %v600
    %v604 = vmul.f32 1.0, %v603
    %v605 = vpack.c.bf16 %v594, %v592
    %606 = vrot.lane.b32.xlu0 %v156, 32
    %v607 = vpop.permute.xlu0 %606
    %v610 = vsel %vm302, %v605, 0
    %612 = vmatprep.subr.bf16.mxu0 0
    %613 = vmatpush1.bf16.msra.mxu0 0
    %614 = vmatprep.subr.bf16.mxu0 0
    %615 = vmatpush1.bf16.msra.mxu0 0
    %616 = vmatprep.subr.bf16.mxu0 0
    %617 = vmatpush1.bf16.msra.mxu0 0
    %618 = vmatprep.subr.bf16.mxu0 0
    %619 = vmatpush1.bf16.msra.mxu0 0
    %620 = vmatprep.subr.bf16.mxu0 0
    %621 = vmatpush1.bf16.msra.mxu0 0
    %622 = vmatprep.subr.bf16.mxu0 0
    %623 = vmatpush1.bf16.msra.mxu0 0
    %624 = vmatprep.subr.bf16.mxu0 0
    %625 = vmatpush1.bf16.msra.mxu0 0
    %626 = vmatprep.subr.bf16.mxu0 0
    %627 = vmatpush1.bf16.msra.mxu0 %v607
    %628 = vmatprep.subr.bf16.mxu0 0
    %629 = vmatpush2.bf16.msra.mxu0 0
    %630 = vmatprep.subr.bf16.mxu0 0
    %631 = vmatpush2.bf16.msra.mxu0 0
    %632 = vmatprep.subr.bf16.mxu0 0
    %633 = vmatpush2.bf16.msra.mxu0 0
    %634 = vmatprep.subr.bf16.mxu0 0
    %635 = vmatpush2.bf16.msra.mxu0 0
    %636 = vmatprep.subr.bf16.mxu0 0
    %637 = vmatpush2.bf16.msra.mxu0 0
    %638 = vmatprep.subr.bf16.mxu0 0
    %639 = vmatpush2.bf16.msra.mxu0 0
    %640 = vmatprep.subr.bf16.mxu0 0
    %641 = vmatpush2.bf16.msra.mxu0 0
    %642 = vmatprep.subr.bf16.mxu0 0
    %643 = vmatpush2.bf16.msra.mxu0 0
    %644 = vmatprep.mubr.bf16.mxu0 0
    %645 = vmatmul.mubr.bf16.gmra.mxu0 %v610
    %v646 = vpop.f32.mrf.mxu0
    %v647 = vadd.f32 0.0, %v646
    %v648 = vpop.f32.mrf.mxu0
    %v649 = vpop.f32.mrf.mxu0
    %v650 = vadd.f32 0.0, %v649
    %v651 = vpop.f32.mrf.mxu0
    %652 = vdwg.mxu0
    %v653 = vmul.f32 %v647, %v602
    %v654 = vmul.f32 %v650, %v604
    %657 = vrot.lane.b32.xlu0 %v465, 32
    %v658 = vpop.permute.xlu0 %657
    %659 = vrot.lane.b32.xlu0 %v466, 32
    %v660 = vpop.permute.xlu0 %659
    %665 = vrot.lane.b32.xlu0 %v559, 64
    %v666 = vpop.permute.xlu0 %665
    %667 = vrot.lane.b32.xlu0 %v560, 64
    %v668 = vpop.permute.xlu0 %667
    %673 = vrot.lane.b32.xlu0 %v653, 96
    %v674 = vpop.permute.xlu0 %673
    %675 = vrot.lane.b32.xlu0 %v654, 96
    %v676 = vpop.permute.xlu0 %675
    %v679 = vsel %vm111, %v370, %v658
    %v680 = vsel %vm111, %v371, %v660
    %vm681 = vcmask 523264
    %v682 = vsel %vm681, %v679, %v666
    %v683 = vsel %vm681, %v680, %v668
    %vm684 = vcmask 785408
    %v685 = vsel %vm684, %v682, %v674
    %v686 = vsel %vm684, %v683, %v676
    %v688 = vlaneseq
    %v689 = vshrl.u32 %v688, 7
    %v690 = vsub.s32 0, %v689
    %v691 = vrot.slane %v93, %v690
    %v693 = vadd.f32 %v685, %v691
    %v694 = vadd.f32 %v686, %v691
    %v695 = vmax.f32 %v693, 0.0
    %v696 = vmax.f32 %v694, 0.0
    %v697 = vpack.c.bf16 %v696, %v695
    %v698 = vld [vmem:[%s7] sm:$0xf]
    %v699 = vld [vmem:[%s7 + $0x4] sm:$0xf]
    %v700 = vld [vmem:[%s7 + $0x8] sm:$0xf]
    %v701 = vld [vmem:[%s7 + $0xc] sm:$0xf]
    %v702 = vld [vmem:[%s7 + $0x10] sm:$0xf]
    %v703 = vld [vmem:[%s7 + $0x14] sm:$0xf]
    %v704 = vld [vmem:[%s7 + $0x18] sm:$0xf]
    %v705 = vld [vmem:[%s7 + $0x1c] sm:$0xf]
    %v706 = vld [vmem:[%s7 + $0x20] sm:$0xf]
    %v707 = vld [vmem:[%s7 + $0x24] sm:$0xf]
    %v708 = vld [vmem:[%s7 + $0x28] sm:$0xf]
    %v709 = vld [vmem:[%s7 + $0x2c] sm:$0xf]
    %v710 = vld [vmem:[%s7 + $0x30] sm:$0xf]
    %v711 = vld [vmem:[%s7 + $0x34] sm:$0xf]
    %v712 = vld [vmem:[%s7 + $0x38] sm:$0xf]
    %v713 = vld [vmem:[%s7 + $0x3c] sm:$0xf]
    %v714 = vld [vmem:[%s8] sm:$0xf]
    %v715 = vld [vmem:[%s8 + $0x4] sm:$0xf]
    %v716 = vld [vmem:[%s8 + $0x8] sm:$0xf]
    %v717 = vld [vmem:[%s8 + $0xc] sm:$0xf]
    %v718 = vld [vmem:[%s9] sm:$0x1]
    %v735 = vunpack.c.l.b16 %v698
    %v736 = vunpack.c.l.b16 %v699
    %v737 = vunpack.c.l.b16 %v700
    %v738 = vunpack.c.l.b16 %v701
    %v739 = vunpack.c.l.b16 %v702
    %v740 = vunpack.c.l.b16 %v703
    %v741 = vunpack.c.l.b16 %v704
    %v742 = vunpack.c.l.b16 %v705
    %v743 = vunpack.c.l.b16 %v706
    %v744 = vunpack.c.l.b16 %v707
    %v745 = vunpack.c.l.b16 %v708
    %v746 = vunpack.c.l.b16 %v709
    %v747 = vunpack.c.l.b16 %v710
    %v748 = vunpack.c.l.b16 %v711
    %v749 = vunpack.c.l.b16 %v712
    %v750 = vunpack.c.l.b16 %v713
    %v751 = vpack.c.b16 %v736, %v735
    %v752 = vpack.c.b16 %v738, %v737
    %v753 = vpack.c.b16 %v740, %v739
    %v754 = vpack.c.b16 %v742, %v741
    %v755 = vpack.c.b16 %v744, %v743
    %v756 = vpack.c.b16 %v746, %v745
    %v757 = vpack.c.b16 %v748, %v747
    %v758 = vpack.c.b16 %v750, %v749
    %767 = vmatprep.subr.bf16.mxu0 0
    %768 = vmatpush1.bf16.msra.mxu0 %v758
    %769 = vmatprep.subr.bf16.mxu0 0
    %770 = vmatpush1.bf16.msra.mxu0 %v757
    %771 = vmatprep.subr.bf16.mxu0 0
    %772 = vmatpush1.bf16.msra.mxu0 %v756
    %773 = vmatprep.subr.bf16.mxu0 0
    %774 = vmatpush1.bf16.msra.mxu0 %v755
    %775 = vmatprep.subr.bf16.mxu0 0
    %776 = vmatpush1.bf16.msra.mxu0 %v754
    %777 = vmatprep.subr.bf16.mxu0 0
    %778 = vmatpush1.bf16.msra.mxu0 %v753
    %779 = vmatprep.subr.bf16.mxu0 0
    %780 = vmatpush1.bf16.msra.mxu0 %v752
    %781 = vmatprep.subr.bf16.mxu0 0
    %782 = vmatpush1.bf16.msra.mxu0 %v751
    %783 = vmatprep.subr.bf16.mxu0 0
    %784 = vmatpush2.bf16.msra.mxu0 0
    %785 = vmatprep.subr.bf16.mxu0 0
    %786 = vmatpush2.bf16.msra.mxu0 0
    %787 = vmatprep.subr.bf16.mxu0 0
    %788 = vmatpush2.bf16.msra.mxu0 0
    %789 = vmatprep.subr.bf16.mxu0 0
    %790 = vmatpush2.bf16.msra.mxu0 0
    %791 = vmatprep.subr.bf16.mxu0 0
    %792 = vmatpush2.bf16.msra.mxu0 0
    %793 = vmatprep.subr.bf16.mxu0 0
    %794 = vmatpush2.bf16.msra.mxu0 0
    %795 = vmatprep.subr.bf16.mxu0 0
    %796 = vmatpush2.bf16.msra.mxu0 0
    %797 = vmatprep.subr.bf16.mxu0 0
    %798 = vmatpush2.bf16.msra.mxu0 0
    %799 = vmatprep.mubr.bf16.mxu0 0
    %800 = vmatmul.mubr.bf16.gmra.mxu0 %v697
    %v801 = vpop.f32.mrf.mxu0
    %v802 = vadd.f32 0.0, %v801
    %v803 = vpop.f32.mrf.mxu0
    %v804 = vpop.f32.mrf.mxu0
    %v805 = vadd.f32 0.0, %v804
    %v806 = vpop.f32.mrf.mxu0
    %807 = vdwg.mxu0
    %v808 = vpack.c.bf16 %v805, %v802
    %v813 = vunpack.c.l.b16 %v714
    %v814 = vunpack.c.l.b16 %v715
    %v815 = vunpack.c.l.b16 %v716
    %v816 = vunpack.c.l.b16 %v717
    %v817 = vpack.c.b16 %v814, %v813
    %v818 = vpack.c.b16 %v816, %v815
    %v822 = vsel %vm111, %v808, 0
    %824 = vmatprep.subr.bf16.mxu0 0
    %825 = vmatpush1.bf16.msra.mxu0 0
    %826 = vmatprep.subr.bf16.mxu0 0
    %827 = vmatpush1.bf16.msra.mxu0 0
    %828 = vmatprep.subr.bf16.mxu0 0
    %829 = vmatpush1.bf16.msra.mxu0 0
    %830 = vmatprep.subr.bf16.mxu0 0
    %831 = vmatpush1.bf16.msra.mxu0 0
    %832 = vmatprep.subr.bf16.mxu0 0
    %833 = vmatpush1.bf16.msra.mxu0 0
    %834 = vmatprep.subr.bf16.mxu0 0
    %835 = vmatpush1.bf16.msra.mxu0 0
    %836 = vmatprep.subr.bf16.mxu0 0
    %837 = vmatpush1.bf16.msra.mxu0 %v818
    %838 = vmatprep.subr.bf16.mxu0 0
    %839 = vmatpush1.bf16.msra.mxu0 %v817
    %840 = vmatprep.subr.bf16.mxu0 0
    %841 = vmatpush2.bf16.msra.mxu0 0
    %842 = vmatprep.subr.bf16.mxu0 0
    %843 = vmatpush2.bf16.msra.mxu0 0
    %844 = vmatprep.subr.bf16.mxu0 0
    %845 = vmatpush2.bf16.msra.mxu0 0
    %846 = vmatprep.subr.bf16.mxu0 0
    %847 = vmatpush2.bf16.msra.mxu0 0
    %848 = vmatprep.subr.bf16.mxu0 0
    %849 = vmatpush2.bf16.msra.mxu0 0
    %850 = vmatprep.subr.bf16.mxu0 0
    %851 = vmatpush2.bf16.msra.mxu0 0
    %852 = vmatprep.subr.bf16.mxu0 0
    %853 = vmatpush2.bf16.msra.mxu0 0
    %854 = vmatprep.subr.bf16.mxu0 0
    %855 = vmatpush2.bf16.msra.mxu0 0
    %856 = vmatprep.mubr.bf16.mxu0 0
    %857 = vmatmul.mubr.bf16.gmra.mxu0 %v822
    %v858 = vpop.f32.mrf.mxu0
    %v859 = vadd.f32 0.0, %v858
    %v860 = vpop.f32.mrf.mxu0
    %v861 = vpop.f32.mrf.mxu0
    %v862 = vadd.f32 0.0, %v861
    %v863 = vpop.f32.mrf.mxu0
    %864 = vdwg.mxu0
    %865 = vxpose.xlu0.b32.start [1/16] %v859, 128
    %866 = vxpose.xlu0.b32.cont [2/16] %v862, 128
    %867 = vxpose.xlu0.b32.cont [3/16] 0.0, 128
    %868 = vxpose.xlu0.b32.cont [4/16] 0.0, 128
    %869 = vxpose.xlu0.b32.cont [5/16] 0.0, 128
    %870 = vxpose.xlu0.b32.cont [6/16] 0.0, 128
    %871 = vxpose.xlu0.b32.cont [7/16] 0.0, 128
    %872 = vxpose.xlu0.b32.cont [8/16] 0.0, 128
    %873 = vxpose.xlu0.b32.cont [9/16] 0.0, 128
    %874 = vxpose.xlu0.b32.cont [10/16] 0.0, 128
    %875 = vxpose.xlu0.b32.cont [11/16] 0.0, 128
    %876 = vxpose.xlu0.b32.cont [12/16] 0.0, 128
    %877 = vxpose.xlu0.b32.cont [13/16] 0.0, 128
    %878 = vxpose.xlu0.b32.cont [14/16] 0.0, 128
    %879 = vxpose.xlu0.b32.cont [15/16] 0.0, 128
    %880 = vxpose.xlu0.b32.end [16/16] 0.0, 128
    %v881 = vpop.trf.xlu0
    %v882 = vpop.trf.xlu0
    %v883 = vpop.trf.xlu0
    %v884 = vpop.trf.xlu0
    %v885 = vpop.trf.xlu0
    %v886 = vpop.trf.xlu0
    %v887 = vpop.trf.xlu0
    %v888 = vpop.trf.xlu0
    %v889 = vpop.trf.xlu0
    %v890 = vpop.trf.xlu0
    %v891 = vpop.trf.xlu0
    %v892 = vpop.trf.xlu0
    %v893 = vpop.trf.xlu0
    %v894 = vpop.trf.xlu0
    %v895 = vpop.trf.xlu0
    %v896 = vpop.trf.xlu0
    %898 = vset.pattern.permute.xlu0 1
    %899 = vperm.xlu0 %898, %v859
    %v900 = vpop.permute.xlu0 %899
    %903 = vset.pattern.permute.xlu0 1
    %904 = vperm.xlu0 %903, %v862
    %v905 = vpop.permute.xlu0 %904
    %v907 = vlaneseq
    %v908 = vshrl.u32 %v907, 7
    %v909 = vsub.s32 0, %v908
    %v910 = vrot.slane %v881, %v909
    %v911 = vadd.f32 %v900, %v910
    %v912 = vadd.f32 %v905, %v910
    %vm913 = vcmp.gt.f32.partialorder %v911, 0.0
    %vm914 = vcmp.gt.f32.partialorder %v912, 0.0
    %v915 = vmul.f32 %v911, 0.2
    %v916 = vmul.f32 %v912, 0.2
    %v917 = vsel %vm913, %v911, %v915
    %v918 = vsel %vm914, %v912, %v916
    %v919 = vadd.f32 %v917, %v69
    %v920 = vadd.f32 %v918, %v70
    %v921 = vsel %vm302, %v919, -inf
    %922 = vmax.xlane.f32.xlu0 %v921
    %v923 = vpop.xlane.xlu0 %922
    %v924 = vsel %vm302, %v920, -inf
    %925 = vmax.xlane.f32.xlu0 %v924
    %v926 = vpop.xlane.xlu0 %925
    %v927 = vsub.f32 %v919, %v923
    %v928 = vsub.f32 %v920, %v926
    %v929 = vmul.f32 %v927, 1.442695
    %v930 = vpow.pop %v929
    %v931 = vmul.f32 %v928, 1.442695
    %v932 = vpow.pop %v931
    %v933 = vsel %vm302, %v930, 0.0
    %934 = vadd.xlane.f32.xlu0 %v933
    %v935 = vpop.xlane.xlu0 %934
    %v936 = vsel %vm302, %v932, 0.0
    %937 = vadd.xlane.f32.xlu0 %v936
    %v938 = vpop.xlane.xlu0 %937
    %v939 = vrcp.pop %v935
    %v940 = vmul.f32 1.0, %v939
    %v941 = vrcp.pop %v938
    %v942 = vmul.f32 1.0, %v941
    %v943 = vpack.c.bf16 %v932, %v930
    %v945 = vsel %vm302, %v943, 0
    %947 = vmatprep.subr.bf16.mxu0 0
    %948 = vmatpush1.bf16.msra.mxu0 0
    %949 = vmatprep.subr.bf16.mxu0 0
    %950 = vmatpush1.bf16.msra.mxu0 0
    %951 = vmatprep.subr.bf16.mxu0 0
    %952 = vmatpush1.bf16.msra.mxu0 0
    %953 = vmatprep.subr.bf16.mxu0 0
    %954 = vmatpush1.bf16.msra.mxu0 0
    %955 = vmatprep.subr.bf16.mxu0 0
    %956 = vmatpush1.bf16.msra.mxu0 0
    %957 = vmatprep.subr.bf16.mxu0 0
    %958 = vmatpush1.bf16.msra.mxu0 0
    %959 = vmatprep.subr.bf16.mxu0 0
    %960 = vmatpush1.bf16.msra.mxu0 0
    %961 = vmatprep.subr.bf16.mxu0 0
    %962 = vmatpush1.bf16.msra.mxu0 %v808
    %963 = vmatprep.subr.bf16.mxu0 0
    %964 = vmatpush2.bf16.msra.mxu0 0
    %965 = vmatprep.subr.bf16.mxu0 0
    %966 = vmatpush2.bf16.msra.mxu0 0
    %967 = vmatprep.subr.bf16.mxu0 0
    %968 = vmatpush2.bf16.msra.mxu0 0
    %969 = vmatprep.subr.bf16.mxu0 0
    %970 = vmatpush2.bf16.msra.mxu0 0
    %971 = vmatprep.subr.bf16.mxu0 0
    %972 = vmatpush2.bf16.msra.mxu0 0
    %973 = vmatprep.subr.bf16.mxu0 0
    %974 = vmatpush2.bf16.msra.mxu0 0
    %975 = vmatprep.subr.bf16.mxu0 0
    %976 = vmatpush2.bf16.msra.mxu0 0
    %977 = vmatprep.subr.bf16.mxu0 0
    %978 = vmatpush2.bf16.msra.mxu0 0
    %979 = vmatprep.mubr.bf16.mxu0 0
    %980 = vmatmul.mubr.bf16.gmra.mxu0 %v945
    %v981 = vpop.f32.mrf.mxu0
    %v982 = vadd.f32 0.0, %v981
    %v983 = vpop.f32.mrf.mxu0
    %v984 = vpop.f32.mrf.mxu0
    %v985 = vadd.f32 0.0, %v984
    %v986 = vpop.f32.mrf.mxu0
    %987 = vdwg.mxu0
    %v988 = vmul.f32 %v982, %v940
    %v989 = vmul.f32 %v985, %v942
    %v991 = vlaneseq
    %v992 = vshrl.u32 %v991, 7
    %v993 = vsub.s32 0, %v992
    %v994 = vrot.slane %v718, %v993
    %v996 = vadd.f32 %v988, %v994
    %v997 = vadd.f32 %v989, %v994
    %v998 = vmax.f32 %v996, 0.0
    %v999 = vmax.f32 %v997, 0.0
    %v1000 = vpack.c.bf16 %v999, %v998
    %v1001 = vld [vmem:[%s10] sm:$0xf]
    %v1002 = vld [vmem:[%s10 + $0x4] sm:$0xf]
    %v1003 = vld [vmem:[%s10 + $0x8] sm:$0xf]
    %v1004 = vld [vmem:[%s10 + $0xc] sm:$0xf]
    %v1009 = vunpack.c.l.b16 %v1001
    %v1010 = vunpack.c.l.b16 %v1002
    %v1011 = vunpack.c.l.b16 %v1003
    %v1012 = vunpack.c.l.b16 %v1004
    %v1013 = vpack.c.b16 %v1010, %v1009
    %v1014 = vpack.c.b16 %v1012, %v1011
    %v1018 = vsel %vm111, %v1000, 0
    %1020 = vmatprep.subr.bf16.mxu0 0
    %1021 = vmatpush1.bf16.msra.mxu0 0
    %1022 = vmatprep.subr.bf16.mxu0 0
    %1023 = vmatpush1.bf16.msra.mxu0 0
    %1024 = vmatprep.subr.bf16.mxu0 0
    %1025 = vmatpush1.bf16.msra.mxu0 0
    %1026 = vmatprep.subr.bf16.mxu0 0
    %1027 = vmatpush1.bf16.msra.mxu0 0
    %1028 = vmatprep.subr.bf16.mxu0 0
    %1029 = vmatpush1.bf16.msra.mxu0 0
    %1030 = vmatprep.subr.bf16.mxu0 0
    %1031 = vmatpush1.bf16.msra.mxu0 0
    %1032 = vmatprep.subr.bf16.mxu0 0
    %1033 = vmatpush1.bf16.msra.mxu0 %v1014
    %1034 = vmatprep.subr.bf16.mxu0 0
    %1035 = vmatpush1.bf16.msra.mxu0 %v1013
    %1036 = vmatprep.subr.bf16.mxu0 0
    %1037 = vmatpush2.bf16.msra.mxu0 0
    %1038 = vmatprep.subr.bf16.mxu0 0
    %1039 = vmatpush2.bf16.msra.mxu0 0
    %1040 = vmatprep.subr.bf16.mxu0 0
    %1041 = vmatpush2.bf16.msra.mxu0 0
    %1042 = vmatprep.subr.bf16.mxu0 0
    %1043 = vmatpush2.bf16.msra.mxu0 0
    %1044 = vmatprep.subr.bf16.mxu0 0
    %1045 = vmatpush2.bf16.msra.mxu0 0
    %1046 = vmatprep.subr.bf16.mxu0 0
    %1047 = vmatpush2.bf16.msra.mxu0 0
    %1048 = vmatprep.subr.bf16.mxu0 0
    %1049 = vmatpush2.bf16.msra.mxu0 0
    %1050 = vmatprep.subr.bf16.mxu0 0
    %1051 = vmatpush2.bf16.msra.mxu0 0
    %1052 = vmatprep.mubr.bf16.mxu0 0
    %1053 = vmatmul.mubr.bf16.gmra.mxu0 %v1018
    %v1054 = vpop.f32.mrf.mxu0
    %v1055 = vadd.f32 0.0, %v1054
    %v1056 = vpop.f32.mrf.mxu0
    %v1057 = vpop.f32.mrf.mxu0
    %v1058 = vadd.f32 0.0, %v1057
    %v1059 = vpop.f32.mrf.mxu0
    %1060 = vdwg.mxu0
    %v1061 = vld [vmem:[%s2] sm:$0xf]
    %v1062 = vld [vmem:[%s2 + $0x4] sm:$0xf]
    %v1063 = vpack.c.bf16 %v1058, %v1055
    %v1064 = vld [vmem:[%s11] sm:$0x1]
    %v1066 = vlaneseq
    %v1067 = vshrl.u32 %v1066, 7
    %v1068 = vsub.s32 0, %v1067
    %v1069 = vrot.slane %v1064, %v1068
    %v1073 = vunpack.c.l.b16 %v1061
    %v1074 = vunpack.c.l.b16 %v1062
    %v1075 = vpack.c.b16 %v1074, %v1073
    %v1077 = vsel %vm302, %v1075, 0
    %1079 = vmatprep.subr.bf16.mxu0 0
    %1080 = vmatpush1.bf16.msra.mxu0 0
    %1081 = vmatprep.subr.bf16.mxu0 0
    %1082 = vmatpush1.bf16.msra.mxu0 0
    %1083 = vmatprep.subr.bf16.mxu0 0
    %1084 = vmatpush1.bf16.msra.mxu0 0
    %1085 = vmatprep.subr.bf16.mxu0 0
    %1086 = vmatpush1.bf16.msra.mxu0 0
    %1087 = vmatprep.subr.bf16.mxu0 0
    %1088 = vmatpush1.bf16.msra.mxu0 0
    %1089 = vmatprep.subr.bf16.mxu0 0
    %1090 = vmatpush1.bf16.msra.mxu0 0
    %1091 = vmatprep.subr.bf16.mxu0 0
    %1092 = vmatpush1.bf16.msra.mxu0 0
    %1093 = vmatprep.subr.bf16.mxu0 0
    %1094 = vmatpush1.bf16.msra.mxu0 %v1063
    %1095 = vmatprep.subr.bf16.mxu0 0
    %1096 = vmatpush2.bf16.msra.mxu0 0
    %1097 = vmatprep.subr.bf16.mxu0 0
    %1098 = vmatpush2.bf16.msra.mxu0 0
    %1099 = vmatprep.subr.bf16.mxu0 0
    %1100 = vmatpush2.bf16.msra.mxu0 0
    %1101 = vmatprep.subr.bf16.mxu0 0
    %1102 = vmatpush2.bf16.msra.mxu0 0
    %1103 = vmatprep.subr.bf16.mxu0 0
    %1104 = vmatpush2.bf16.msra.mxu0 0
    %1105 = vmatprep.subr.bf16.mxu0 0
    %1106 = vmatpush2.bf16.msra.mxu0 0
    %1107 = vmatprep.subr.bf16.mxu0 0
    %1108 = vmatpush2.bf16.msra.mxu0 0
    %1109 = vmatprep.subr.bf16.mxu0 0
    %1110 = vmatpush2.bf16.msra.mxu0 0
    %1111 = vmatprep.mubr.bf16.mxu0 0
    %1112 = vmatmul.mubr.bf16.gmra.mxu0 %v1077
    %v1113 = vpop.f32.mrf.mxu0
    %v1114 = vadd.f32 %v1069, %v1113
    %v1115 = vpop.f32.mrf.mxu0
    %v1116 = vpop.f32.mrf.mxu0
    %v1117 = vadd.f32 %v1069, %v1116
    %v1118 = vpop.f32.mrf.mxu0
    %1119 = vdwg.mxu0
    %v1120 = vmax.f32 %v1114, 0.0
    %v1121 = vmax.f32 %v1117, 0.0
    %v1122 = vpack.c.bf16 %v1121, %v1120
    %v1123 = vld [vmem:[%s3] sm:$0x1]
    %v1125 = vsel %vm302, %v1123, 0
    %1127 = vmatprep.subr.bf16.mxu0 0
    %1128 = vmatpush1.bf16.msra.mxu0 0
    %1129 = vmatprep.subr.bf16.mxu0 0
    %1130 = vmatpush1.bf16.msra.mxu0 0
    %1131 = vmatprep.subr.bf16.mxu0 0
    %1132 = vmatpush1.bf16.msra.mxu0 0
    %1133 = vmatprep.subr.bf16.mxu0 0
    %1134 = vmatpush1.bf16.msra.mxu0 0
    %1135 = vmatprep.subr.bf16.mxu0 0
    %1136 = vmatpush1.bf16.msra.mxu0 0
    %1137 = vmatprep.subr.bf16.mxu0 0
    %1138 = vmatpush1.bf16.msra.mxu0 0
    %1139 = vmatprep.subr.bf16.mxu0 0
    %1140 = vmatpush1.bf16.msra.mxu0 0
    %1141 = vmatprep.subr.bf16.mxu0 0
    %1142 = vmatpush1.bf16.msra.mxu0 %v1122
    %1143 = vmatprep.subr.bf16.mxu0 0
    %1144 = vmatpush2.bf16.msra.mxu0 0
    %1145 = vmatprep.subr.bf16.mxu0 0
    %1146 = vmatpush2.bf16.msra.mxu0 0
    %1147 = vmatprep.subr.bf16.mxu0 0
    %1148 = vmatpush2.bf16.msra.mxu0 0
    %1149 = vmatprep.subr.bf16.mxu0 0
    %1150 = vmatpush2.bf16.msra.mxu0 0
    %1151 = vmatprep.subr.bf16.mxu0 0
    %1152 = vmatpush2.bf16.msra.mxu0 0
    %1153 = vmatprep.subr.bf16.mxu0 0
    %1154 = vmatpush2.bf16.msra.mxu0 0
    %1155 = vmatprep.subr.bf16.mxu0 0
    %1156 = vmatpush2.bf16.msra.mxu0 0
    %1157 = vmatprep.subr.bf16.mxu0 0
    %1158 = vmatpush2.bf16.msra.mxu0 0
    %1159 = vmatprep.mubr.bf16.mxu0 0
    %1160 = vmatmul.mubr.bf16.gmra.mxu0 %v1125
    %v1161 = vpop.f32.mrf.mxu0
    %v1162 = vadd.f32 0.0, %v1161
    %v1163 = vpop.f32.mrf.mxu0
    %v1164 = vpop.f32.mrf.mxu0
    %v1165 = vpop.f32.mrf.mxu0
    %1166 = vdwg.mxu0
    %v1167 = vpack.c.bf16 %v1162, %v1162
    %v1168 = vld [vmem:[%s12] sm:$0xf]
    %v1169 = vld [vmem:[%s12 + $0x4] sm:$0xf]
    %v1170 = vld [vmem:[%s13] sm:$0x1]
    %v1172 = vlaneseq
    %v1173 = vshrl.u32 %v1172, 7
    %v1174 = vsub.s32 0, %v1173
    %v1175 = vrot.slane %v1170, %v1174
    %v1179 = vunpack.c.l.b16 %v1168
    %v1180 = vunpack.c.l.b16 %v1169
    %v1181 = vpack.c.b16 %v1180, %v1179
    %v1184 = vsel %vm302, %v1167, 0
    %1186 = vmatprep.subr.bf16.mxu0 0
    %1187 = vmatpush1.bf16.msra.mxu0 0
    %1188 = vmatprep.subr.bf16.mxu0 0
    %1189 = vmatpush1.bf16.msra.mxu0 0
    %1190 = vmatprep.subr.bf16.mxu0 0
    %1191 = vmatpush1.bf16.msra.mxu0 0
    %1192 = vmatprep.subr.bf16.mxu0 0
    %1193 = vmatpush1.bf16.msra.mxu0 0
    %1194 = vmatprep.subr.bf16.mxu0 0
    %1195 = vmatpush1.bf16.msra.mxu0 0
    %1196 = vmatprep.subr.bf16.mxu0 0
    %1197 = vmatpush1.bf16.msra.mxu0 0
    %1198 = vmatprep.subr.bf16.mxu0 0
    %1199 = vmatpush1.bf16.msra.mxu0 0
    %1200 = vmatprep.subr.bf16.mxu0 0
    %1201 = vmatpush1.bf16.msra.mxu0 %v1181
    %1202 = vmatprep.subr.bf16.mxu0 0
    %1203 = vmatpush2.bf16.msra.mxu0 0
    %1204 = vmatprep.subr.bf16.mxu0 0
    %1205 = vmatpush2.bf16.msra.mxu0 0
    %1206 = vmatprep.subr.bf16.mxu0 0
    %1207 = vmatpush2.bf16.msra.mxu0 0
    %1208 = vmatprep.subr.bf16.mxu0 0
    %1209 = vmatpush2.bf16.msra.mxu0 0
    %1210 = vmatprep.subr.bf16.mxu0 0
    %1211 = vmatpush2.bf16.msra.mxu0 0
    %1212 = vmatprep.subr.bf16.mxu0 0
    %1213 = vmatpush2.bf16.msra.mxu0 0
    %1214 = vmatprep.subr.bf16.mxu0 0
    %1215 = vmatpush2.bf16.msra.mxu0 0
    %1216 = vmatprep.subr.bf16.mxu0 0
    %1217 = vmatpush2.bf16.msra.mxu0 0
    %1218 = vmatprep.mubr.bf16.mxu0 0
    %1219 = vmatmul.mubr.bf16.gmra.mxu0 %v1184
    %v1220 = vpop.f32.mrf.mxu0
    %v1221 = vadd.f32 %v1175, %v1220
    %v1222 = vpop.f32.mrf.mxu0
    %v1223 = vpop.f32.mrf.mxu0
    %v1224 = vpop.f32.mrf.mxu0
    %1225 = vdwg.mxu0
    %v1226 = vmax.f32 %v1221, 0.0
    %v1227 = vpack.c.bf16 %v1226, %v1226
    %v1228 = vld [vmem:[%s14] sm:$0xf]
    %v1229 = vld [vmem:[%s14 + $0x4] sm:$0xf]
    %v1230 = vld [vmem:[%s14 + $0x8] sm:$0xf]
    %v1231 = vld [vmem:[%s14 + $0xc] sm:$0xf]
    %v1232 = vld [vmem:[%s15] sm:$0x1]
    %v1234 = vlaneseq
    %v1235 = vshrl.u32 %v1234, 7
    %v1236 = vsub.s32 0, %v1235
    %v1237 = vrot.slane %v1232, %v1236
    %v1243 = vunpack.c.l.b16 %v1228
    %v1244 = vunpack.c.l.b16 %v1229
    %v1245 = vunpack.c.l.b16 %v1230
    %v1246 = vunpack.c.l.b16 %v1231
    %v1247 = vpack.c.b16 %v1244, %v1243
    %v1248 = vpack.c.b16 %v1246, %v1245
    %v1252 = vsel %vm111, %v1227, 0
    %1254 = vmatprep.subr.bf16.mxu0 0
    %1255 = vmatpush1.bf16.msra.mxu0 0
    %1256 = vmatprep.subr.bf16.mxu0 0
    %1257 = vmatpush1.bf16.msra.mxu0 0
    %1258 = vmatprep.subr.bf16.mxu0 0
    %1259 = vmatpush1.bf16.msra.mxu0 0
    %1260 = vmatprep.subr.bf16.mxu0 0
    %1261 = vmatpush1.bf16.msra.mxu0 0
    %1262 = vmatprep.subr.bf16.mxu0 0
    %1263 = vmatpush1.bf16.msra.mxu0 0
    %1264 = vmatprep.subr.bf16.mxu0 0
    %1265 = vmatpush1.bf16.msra.mxu0 0
    %1266 = vmatprep.subr.bf16.mxu0 0
    %1267 = vmatpush1.bf16.msra.mxu0 %v1248
    %1268 = vmatprep.subr.bf16.mxu0 0
    %1269 = vmatpush1.bf16.msra.mxu0 %v1247
    %1270 = vmatprep.subr.bf16.mxu0 0
    %1271 = vmatpush2.bf16.msra.mxu0 0
    %1272 = vmatprep.subr.bf16.mxu0 0
    %1273 = vmatpush2.bf16.msra.mxu0 0
    %1274 = vmatprep.subr.bf16.mxu0 0
    %1275 = vmatpush2.bf16.msra.mxu0 0
    %1276 = vmatprep.subr.bf16.mxu0 0
    %1277 = vmatpush2.bf16.msra.mxu0 0
    %1278 = vmatprep.subr.bf16.mxu0 0
    %1279 = vmatpush2.bf16.msra.mxu0 0
    %1280 = vmatprep.subr.bf16.mxu0 0
    %1281 = vmatpush2.bf16.msra.mxu0 0
    %1282 = vmatprep.subr.bf16.mxu0 0
    %1283 = vmatpush2.bf16.msra.mxu0 0
    %1284 = vmatprep.subr.bf16.mxu0 0
    %1285 = vmatpush2.bf16.msra.mxu0 0
    %1286 = vmatprep.mubr.bf16.mxu0 0
    %1287 = vmatmul.mubr.bf16.gmra.mxu0 %v1252
    %v1288 = vpop.f32.mrf.mxu0
    %v1289 = vadd.f32 %v1237, %v1288
    %v1290 = vpop.f32.mrf.mxu0
    %v1291 = vpop.f32.mrf.mxu0
    %v1292 = vpop.f32.mrf.mxu0
    %1293 = vdwg.mxu0
    %v1294 = vmax.f32 %v1289, 0.0
    %v1295 = vpack.c.bf16 %v1294, %v1294
    %v1296 = vld [vmem:[%s16] sm:$0xf]
    %v1297 = vld [vmem:[%s16 + $0x4] sm:$0xf]
    %v1298 = vld [vmem:[#allocation2] sm:$0x1]
    %v1300 = vlaneseq
    %v1301 = vshrl.u32 %v1300, 7
    %v1302 = vsub.s32 0, %v1301
    %v1303 = vrot.slane %v1298, %v1302
    %v1307 = vunpack.c.l.b16 %v1296
    %v1308 = vunpack.c.l.b16 %v1297
    %v1309 = vpack.c.b16 %v1308, %v1307
    %v1312 = vsel %vm302, %v1295, 0
    %1314 = vmatprep.subr.bf16.mxu0 0
    %1315 = vmatpush1.bf16.msra.mxu0 0
    %1316 = vmatprep.subr.bf16.mxu0 0
    %1317 = vmatpush1.bf16.msra.mxu0 0
    %1318 = vmatprep.subr.bf16.mxu0 0
    %1319 = vmatpush1.bf16.msra.mxu0 0
    %1320 = vmatprep.subr.bf16.mxu0 0
    %1321 = vmatpush1.bf16.msra.mxu0 0
    %1322 = vmatprep.subr.bf16.mxu0 0
    %1323 = vmatpush1.bf16.msra.mxu0 0
    %1324 = vmatprep.subr.bf16.mxu0 0
    %1325 = vmatpush1.bf16.msra.mxu0 0
    %1326 = vmatprep.subr.bf16.mxu0 0
    %1327 = vmatpush1.bf16.msra.mxu0 0
    %1328 = vmatprep.subr.bf16.mxu0 0
    %1329 = vmatpush1.bf16.msra.mxu0 %v1309
    %1330 = vmatprep.subr.bf16.mxu0 0
    %1331 = vmatpush2.bf16.msra.mxu0 0
    %1332 = vmatprep.subr.bf16.mxu0 0
    %1333 = vmatpush2.bf16.msra.mxu0 0
    %1334 = vmatprep.subr.bf16.mxu0 0
    %1335 = vmatpush2.bf16.msra.mxu0 0
    %1336 = vmatprep.subr.bf16.mxu0 0
    %1337 = vmatpush2.bf16.msra.mxu0 0
    %1338 = vmatprep.subr.bf16.mxu0 0
    %1339 = vmatpush2.bf16.msra.mxu0 0
    %1340 = vmatprep.subr.bf16.mxu0 0
    %1341 = vmatpush2.bf16.msra.mxu0 0
    %1342 = vmatprep.subr.bf16.mxu0 0
    %1343 = vmatpush2.bf16.msra.mxu0 0
    %1344 = vmatprep.subr.bf16.mxu0 0
    %1345 = vmatpush2.bf16.msra.mxu0 0
    %1346 = vmatprep.mubr.bf16.mxu0 0
    %1347 = vmatmul.mubr.bf16.gmra.mxu0 %v1312
    %v1348 = vpop.f32.mrf.mxu0
    %v1349 = vadd.f32 %v1303, %v1348
    %v1350 = vpop.f32.mrf.mxu0
    %v1351 = vpop.f32.mrf.mxu0
    %v1352 = vpop.f32.mrf.mxu0
    %1353 = vdwg.mxu0
    %v1354 = vxor.u32 %v1349, 2147483648
    %v1355 = vmul.f32 %v1354, 1.442695
    %v1356 = vpow.pop %v1355
    %v1357 = vadd.f32 %v1356, 1.0
    %v1358 = vrcp.pop %v1357
    %v1359 = vmul.f32 1.0, %v1358
    %v1360 = vld [vmem:[%s18] sm:$0xf]
    %v1361 = vld [vmem:[%s18 + $0x4] sm:$0xf]
    %v1362 = vld [vmem:[%s19] sm:$0x1]
    %v1364 = vlaneseq
    %v1365 = vshrl.u32 %v1364, 7
    %v1366 = vsub.s32 0, %v1365
    %v1367 = vrot.slane %v1362, %v1366
    %v1371 = vunpack.c.l.b16 %v1360
    %v1372 = vunpack.c.l.b16 %v1361
    %v1373 = vpack.c.b16 %v1372, %v1371
    %1375 = vmatprep.subr.bf16.mxu0 0
    %1376 = vmatpush1.bf16.msra.mxu0 0
    %1377 = vmatprep.subr.bf16.mxu0 0
    %1378 = vmatpush1.bf16.msra.mxu0 0
    %1379 = vmatprep.subr.bf16.mxu0 0
    %1380 = vmatpush1.bf16.msra.mxu0 0
    %1381 = vmatprep.subr.bf16.mxu0 0
    %1382 = vmatpush1.bf16.msra.mxu0 0
    %1383 = vmatprep.subr.bf16.mxu0 0
    %1384 = vmatpush1.bf16.msra.mxu0 0
    %1385 = vmatprep.subr.bf16.mxu0 0
    %1386 = vmatpush1.bf16.msra.mxu0 0
    %1387 = vmatprep.subr.bf16.mxu0 0
    %1388 = vmatpush1.bf16.msra.mxu0 0
    %1389 = vmatprep.subr.bf16.mxu0 0
    %1390 = vmatpush1.bf16.msra.mxu0 %v1373
    %1391 = vmatprep.subr.bf16.mxu0 0
    %1392 = vmatpush2.bf16.msra.mxu0 0
    %1393 = vmatprep.subr.bf16.mxu0 0
    %1394 = vmatpush2.bf16.msra.mxu0 0
    %1395 = vmatprep.subr.bf16.mxu0 0
    %1396 = vmatpush2.bf16.msra.mxu0 0
    %1397 = vmatprep.subr.bf16.mxu0 0
    %1398 = vmatpush2.bf16.msra.mxu0 0
    %1399 = vmatprep.subr.bf16.mxu0 0
    %1400 = vmatpush2.bf16.msra.mxu0 0
    %1401 = vmatprep.subr.bf16.mxu0 0
    %1402 = vmatpush2.bf16.msra.mxu0 0
    %1403 = vmatprep.subr.bf16.mxu0 0
    %1404 = vmatpush2.bf16.msra.mxu0 0
    %1405 = vmatprep.subr.bf16.mxu0 0
    %1406 = vmatpush2.bf16.msra.mxu0 0
    %1407 = vmatprep.mubr.bf16.mxu0 0
    %1408 = vmatmul.mubr.bf16.gmra.mxu0 %v1184
    %v1409 = vpop.f32.mrf.mxu0
    %v1410 = vadd.f32 %v1367, %v1409
    %v1411 = vpop.f32.mrf.mxu0
    %v1412 = vpop.f32.mrf.mxu0
    %v1413 = vpop.f32.mrf.mxu0
    %1414 = vdwg.mxu0
    %v1415 = vtanh.pop %v1410
    %1417 = vrot.lane.b32.xlu0 %v1359, 16
    %v1418 = vpop.permute.xlu0 %1417
    %v1420 = vsel %vm302, %v1415, %v1418
    %vm1421 = vcmask 138240
    %v1422 = vsel %vm1421, %v1420, 0.0
    %1423 = vst [vmem:[#allocation3] sm:$0x3] %v1422
    // Predicated region
    $region82: #{tpu_custom_call.1} parent=1 // pred_check
      _
    $region83: #{tpu_custom_call.1} parent=1 // pred_check_branch
      %1425 = sbr.rel (0) target = $region85
    $region84: #{tpu_custom_call.1} parent=1 // pred_region
      %s1427 = ssub.s32 32, 32
      %1428 = vsyncadd [#allocation4], %s1427
      %s1430 = sshll.u32 [#allocation3], 4
      %s1431 = int_to_ptr.vmem [resolvable:$true] %s1430
      %1433 = dma.vmem_to_hbm [thread:$0]  %s1431, 32, %s20, [#allocation4]
    $region85: #{tpu_custom_call.1} parent=1 // pred_fallthru
      _
    // Predicated region
    $region86: #{tpu_custom_call.1} parent=1 // pred_check
      _
    $region87: #{tpu_custom_call.1} parent=1 // pred_check_branch
      %1435 = sbr.rel (0) target = $region89
    $region88: #{tpu_custom_call.1} parent=1 // pred_region
      %1436 = dma.done [#allocation4], 32
    $region89: #{tpu_custom_call.1} parent=1 // pred_fallthru
      _
    %1437 = vsyncpa [#allocation4], 1

</llo_original>
